<compile_context>
chip_gen: v7x
topology: tpu7x:2x2x1
jax: 0.10.0
libtpu: 0.0.40
codegen_flags: <defaults>
</compile_context>

<pallas_src>
import functools

import jax
import jax.numpy as jnp
from jax import lax
from jax.experimental import pallas as pl
from jax.experimental.pallas import tpu as pltpu

# ---- LIF / readout hyper-parameters (would come from srnn_args) -------------
DECAY = 0.5        # membrane decay of recurrent LIF neurons
THRESH = 0.5       # firing threshold
OUT_DECAY = 0.8    # readout leaky-integrator decay


# -----------------------------------------------------------------------------
# block-size helpers (all trace-time Python)
# -----------------------------------------------------------------------------
def _largest_divisor_leq(n, cap):
    cap = max(1, min(int(cap), int(n)))
    for d in range(cap, 0, -1):
        if n % d == 0:
            return d
    return 1


def _pick_batch_block(b, cap):
    """Largest divisor of b that is <= cap and sublane-aligned (mult of 8) or full."""
    cap = max(1, min(int(cap), int(b)))
    for d in range(cap, 0, -1):
        if b % d == 0 and (d % 8 == 0 or d == b):
            return d
    return b


# -----------------------------------------------------------------------------
# kernel
# -----------------------------------------------------------------------------
def _make_kernel(tc, unroll):
    """LIF recurrence over one (batch-block, time-chunk) grid cell."""

    def kernel(cur_ref,        # [Tc, Bc, H]  bf16/f32  precomputed input currents (x@W_in + b_rnn)
               w_rec_ref,      # [H, H]       bf16      recurrent weights
               spikes_ref,     # [Tc, Bc, H]  bf16/f32  spike record (time-major)
               uacc_ref,       # [Bc, H]      f32       sum_t of leaky readout trace (resident over time axis)
               mem_sc,         # [Bc, H]      f32       membrane potential
               spk_sc,         # [Bc, H]      bf16      last spike
               u_sc):          # [Bc, H]      f32       leaky readout trace
        c = pl.program_id(1)   # time-chunk index (innermost, "arbitrary")

        # ---- init carried state at the first time chunk of this batch block ----
        @pl.when(c == 0)
        def _():
            mem_sc[...] = jnp.zeros_like(mem_sc)
            spk_sc[...] = jnp.zeros_like(spk_sc)
            u_sc[...] = jnp.zeros_like(u_sc)
            uacc_ref[...] = jnp.zeros_like(uacc_ref)

        w_rec = w_rec_ref[...]

        # ---- LIF recurrence over the Tc timesteps of this chunk ----------------
        # Only (mem, spk) is carried in registers; u / uacc live in VMEM (off the
        # serial chain) to keep vreg pressure at two [Bc,H] f32 tiles.
        def step(j, carry):
            mem, spk = carry                                       # f32, bf16
            cur = cur_ref[j].astype(jnp.float32) + jnp.dot(
                spk, w_rec, preferred_element_type=jnp.float32)
            mem = DECAY * mem * (1.0 - spk) + cur                  # bf16 {0,1} is exact
            spk_new = (mem >= THRESH).astype(jnp.bfloat16)
            spikes_ref[j] = spk_new.astype(spikes_ref.dtype)       # record hidden spikes
            # deferred readout: leaky trace in H-space + its running sum
            u = OUT_DECAY * u_sc[...] + spk_new
            u_sc[...] = u
            uacc_ref[...] = uacc_ref[...] + u
            return mem, spk_new

        mem, spk = lax.fori_loop(0, tc, step,
                                 (mem_sc[...], spk_sc[...]),
                                 unroll=unroll)
        mem_sc[...] = mem
        spk_sc[...] = spk

    return kernel


# -----------------------------------------------------------------------------
# wrapper
# -----------------------------------------------------------------------------
def spasrnn_forward(feed_data, wordemb_matrix, w_in, w_rec, b_rnn, w_out, b_out,
                    *, time_chunk=64, batch_block=128):
    """feed_data: int32 token ids [B, T].

    Returns (snn_out [B, O] f32, spikes [T, B, H] — time-major by design)."""
    B, T = feed_data.shape
    H = w_in.shape[1]

    # ---- batch block: fill MXU rows on the serial spk@W_rec matmul -------------
    bc = _pick_batch_block(B, batch_block)
    # v7x has 2 TensorCores/chip: make sure the "parallel" batch axis has >= 2
    # blocks, halving bc if the halved block stays sublane-aligned.
    try:
        kind = jax.devices()[0].device_kind.lower()
        two_tc = ("v7" in kind) or ("7x" in kind)
    except Exception:
        two_tc = False
    if two_tc and B // bc < 2 and bc % 16 == 0 and bc >= 16:
        bc //= 2
    n_bblocks = B // bc

    # bf16 streaming (cur_in + spike record) only when the batch block packs full
    # (16,128) bf16 tiles; otherwise keep f32 so the writeback stays unmasked.
    use_bf16_stream = (bc % 16 == 0)
    stream_dtype = jnp.bfloat16 if use_bf16_stream else jnp.float32
    stream_bytes = 2 if use_bf16_stream else 4
    # TODO(synk): bf16 input currents can flip spikes whose membrane lands within
    # bf16 rounding of THRESH vs an all-f32 run; keep cur_in f32 if exact parity
    # with the f32 PyTorch reference is required.

    # Grid-invariant recurrent weight: single-buffer it once it gets big so it
    # doesn't eat the chunk-pipelining VMEM budget (relevant on v7x's 64 MiB).
    w_rec_bytes = H * H * 2
    if w_rec_bytes >= (1 << 20):
        w_rec_spec = pl.BlockSpec((H, H), lambda b, c: (0, 0),
                                  pipeline_mode=pl.Buffered(1))
        w_bufs = 1
    else:
        w_rec_spec = pl.BlockSpec((H, H), lambda b, c: (0, 0))
        w_bufs = 2

    # Per-generation VMEM budget: ~3/4 of physical -> 48 MiB on v7x, ~96 MiB on
    # v5e/v6e (which have 128 MiB physical).  Fallback is the v7x-safe number.
    try:
        vmem_cap = int(pltpu.get_tpu_info().vmem_capacity_bytes)
    except Exception:
        vmem_cap = 64 * 1024 * 1024
    vmem_limit = min(vmem_cap * 3 // 4, 100 * 1024 * 1024)

    # ---- time chunk: big enough for multi-hundred-KB DMAs, sized against VMEM --
    def _resident_bytes(tc_):
        return (2 * tc_ * bc * H * stream_bytes     # cur_in chunk, double-buffered
                + 2 * tc_ * bc * H * stream_bytes   # spike chunk, double-buffered
                + w_bufs * w_rec_bytes              # W_rec
                + 2 * bc * H * 4                    # uacc output block
                + bc * H * (4 + 2 + 4))             # mem / spk(bf16) / u scratch

    tc = _largest_divisor_leq(T, time_chunk)
    while tc > 1 and _resident_bytes(tc) > int(0.6 * vmem_limit):
        tc = _largest_divisor_leq(T, tc - 1)
    n_chunks = T // tc

    # vreg pressure: full unroll only while each carried [bc,H] f32 tile is small;
    # otherwise partial unroll (carry is only 2 tiles, but keep headroom).
    unroll = True if bc * H <= 4096 else 2

    # ---- off-the-serial-path glue (plain XLA, near MXU peak) -------------------
    # Embedding gather directly in time-major order (transposing int32 ids ~free).
    embed_tm = jnp.take(wordemb_matrix, feed_data.T, axis=0)          # [T, B, E]
    # Input projection hoisted for ALL timesteps as one big bf16 matmul.
    cur_in = (jnp.einsum('tbe,eh->tbh',
                         embed_tm.astype(jnp.bfloat16),
                         w_in.astype(jnp.bfloat16),
                         preferred_element_type=jnp.float32)
              + b_rnn.astype(jnp.float32))                            # [T, B, H] f32
    cur_in = cur_in.astype(stream_dtype)                              # halve HBM stream when possible

    kernel = _make_kernel(tc, unroll)

    spikes_tm, uacc = pl.pallas_call(
        kernel,
        out_shape=(jax.ShapeDtypeStruct((T, B, H), stream_dtype),     # spike record
                   jax.ShapeDtypeStruct((B, H), jnp.float32)),        # readout accumulator
        grid_spec=pltpu.PrefetchScalarGridSpec(
            num_scalar_prefetch=0,
            grid=(n_bblocks, n_chunks),                               # (batch blocks, time chunks)
            in_specs=[
                pl.BlockSpec((tc, bc, H), lambda b, c: (c, b, 0)),    # input currents
                w_rec_spec,                                           # W_rec (bf16)
            ],
            out_specs=[
                pl.BlockSpec((tc, bc, H), lambda b, c: (c, b, 0)),    # spikes (time-major)
                pl.BlockSpec((bc, H), lambda b, c: (b, 0)),           # uacc (resident over c)
            ],
            scratch_shapes=[pltpu.VMEM((bc, H), jnp.float32),         # mem
                            pltpu.VMEM((bc, H), jnp.bfloat16),        # spk
                            pltpu.VMEM((bc, H), jnp.float32)],        # u (leaky trace)
        ),
        compiler_params=pltpu.CompilerParams(
            # batch blocks are independent -> megacore parallel on v7x;
            # the time recurrence must stay sequential -> arbitrary.
            dimension_semantics=("parallel", "arbitrary"),
            vmem_limit_bytes=int(vmem_limit)),
    )(cur_in, w_rec.astype(jnp.bfloat16))

    # ---- readout done ONCE in the wrapper, full f32 (O is lane-sparse) ---------
    # out_mem[t] = d*out_mem[t-1] + spk[t]@W_out + b_out
    #   => sum_t out_mem[t] = uacc @ W_out + bias_coef * b_out
    bias_coef = 0.0
    v = 0.0
    for _ in range(T):
        v = OUT_DECAY * v + 1.0
        bias_coef += v
    logits = (jnp.dot(uacc, w_out.astype(jnp.float32),
                      preferred_element_type=jnp.float32)
              + bias_coef * b_out.astype(jnp.float32)) / float(T)
    snn_out = jax.nn.softmax(logits, axis=-1)
    # TODO(synk): readout assumes softmax(mean_t out_mem[t]); if the PyTorch
    # SNNReadoutModuleSoftmaxForRecord applied softmax per timestep before
    # averaging, the deferral would not commute and must move back per-step.

    return snn_out, spikes_tm


# -----------------------------------------------------------------------------
# pure-JAX reference (same math, same bf16 input-current stream)
# -----------------------------------------------------------------------------
def _reference_forward(cur_stream, w_rec_bf16, w_out, b_out, bias_coef):
    T, B, H = cur_stream.shape

    def step(carry, cur_t):
        mem, spk, u, uacc = carry
        cur = cur_t.astype(jnp.float32) + jnp.dot(spk, w_rec_bf16,
                                                  preferred_element_type=jnp.float32)
        mem = DECAY * mem * (1.0 - spk) + cur
        spk_new = (mem >= THRESH).astype(jnp.bfloat16)
        u = OUT_DECAY * u + spk_new
        uacc = uacc + u
        return (mem, spk_new, u, uacc), spk_new

    init = (jnp.zeros((B, H), jnp.float32), jnp.zeros((B, H), jnp.bfloat16),
            jnp.zeros((B, H), jnp.float32), jnp.zeros((B, H), jnp.float32))
    (_, _, _, uacc), spikes = lax.scan(step, init, cur_stream)
    logits = (jnp.dot(uacc, w_out.astype(jnp.float32),
                      preferred_element_type=jnp.float32)
              + bias_coef * b_out.astype(jnp.float32)) / float(T)
    return jax.nn.softmax(logits, axis=-1), spikes


if __name__ == "__main__":
    # Small, deterministic synthetic configuration.  H is a multiple of 128 so
    # all stores are lane-dense.  The small blocks passed below are purely to
    # exercise the multi-batch-block / multi-time-chunk grid path; production
    # defaults are batch_block=128, time_chunk=64.
    VOCAB, EMB_DIM, HID_DIM, OUT_DIM = 50, 32, 128, 8
    B, T = 32, 32

    key = jax.random.PRNGKey(0)
    k_emb, k_win, k_wrec, k_wout, k_ids = jax.random.split(key, 5)

    wordemb_matrix = jax.random.normal(k_emb, (VOCAB, EMB_DIM), jnp.float32) * 0.1
    w_in = jax.random.normal(k_win, (EMB_DIM, HID_DIM), jnp.float32) * 0.3
    w_rec = jax.random.normal(k_wrec, (HID_DIM, HID_DIM), jnp.float32) * 0.1
    b_rnn = jnp.zeros((1, HID_DIM), jnp.float32)
    w_out = jax.random.normal(k_wout, (HID_DIM, OUT_DIM), jnp.float32) * 0.2
    b_out = jnp.zeros((1, OUT_DIM), jnp.float32)

    feed_data = jax.random.randint(k_ids, (B, T), 0, VOCAB, dtype=jnp.int32)

    fwd = jax.jit(functools.partial(spasrnn_forward, time_chunk=8, batch_block=16))
    snn_out, spikes_tm = fwd(feed_data, wordemb_matrix, w_in, w_rec,
                             b_rnn, w_out, b_out)
    jax.block_until_ready((snn_out, spikes_tm))

    # structural checks
    assert snn_out.shape == (B, OUT_DIM)
    assert spikes_tm.shape == (T, B, HID_DIM)            # time-major spike record
    spk_f32 = spikes_tm.astype(jnp.float32)
    assert bool(jnp.all((spk_f32 == 0.0) | (spk_f32 == 1.0)))
    assert bool(jnp.allclose(jnp.sum(snn_out, axis=-1), 1.0, atol=1e-5))
    assert bool(jnp.all(snn_out >= 0.0) and jnp.all(snn_out <= 1.0))

    # pure-JAX reference check (same bf16 current stream the kernel consumes;
    # bc=16 in this configuration -> bf16 streaming path).
    embed_tm = jnp.take(wordemb_matrix, feed_data.T, axis=0)
    cur_stream = (jnp.einsum('tbe,eh->tbh', embed_tm.astype(jnp.bfloat16),
                             w_in.astype(jnp.bfloat16),
                             preferred_element_type=jnp.float32)
                  + b_rnn).astype(jnp.bfloat16)
    bias_coef = 0.0
    v = 0.0
    for _ in range(T):
        v = OUT_DECAY * v + 1.0
        bias_coef += v
    ref_out, ref_spikes = jax.jit(_reference_forward)(
        cur_stream, w_rec.astype(jnp.bfloat16), w_out, b_out,
        jnp.float32(bias_coef))
    jax.block_until_ready((ref_out, ref_spikes))

    assert bool(jnp.array_equal(spk_f32, ref_spikes.astype(jnp.float32)))
    assert bool(jnp.allclose(snn_out, ref_out, atol=1e-5, rtol=1e-5))

    # TODO(synk): torch.nn.Dropout is treated as inference-mode identity; the
    # unused self.fc head (not called in forward()) is not implemented.
    print("KERNEL_OK")
</pallas_src>

<mosaic_0001>
module attributes {stable_mosaic.version = 11 : i64} {
  func.func @kernel(%arg0: i32, %arg1: i32, %arg2: memref<8x16x128xbf16, #tpu.memory_space<vmem>>, %arg3: memref<128x128xbf16, #tpu.memory_space<vmem>>, %arg4: memref<8x16x128xbf16, #tpu.memory_space<vmem>>, %arg5: memref<16x128xf32, #tpu.memory_space<vmem>>, %arg6: memref<16x128xf32, #tpu.memory_space<vmem>>, %arg7: memref<16x128xbf16, #tpu.memory_space<vmem>>, %arg8: memref<16x128xf32, #tpu.memory_space<vmem>>) attributes {dimension_semantics = [#tpu.dimension_semantics<parallel>, #tpu.dimension_semantics<arbitrary>], iteration_bounds = array<i64: 2, 4>, scalar_prefetch = 0 : i64, scratch_operands = 3 : i64, tpu.core_type = #tpu.core_type<tc>, window_params = [{transform_indices = @transform_0, window_bounds = array<i64: 8, 16, 128>}, {pipeline_mode = #tpu.pipeline_mode<synchronous>, transform_indices = @transform_1, window_bounds = array<i64: 128, 128>}, {transform_indices = @transform_2, window_bounds = array<i64: 8, 16, 128>}, {transform_indices = @transform_3, window_bounds = array<i64: 16, 128>}]} {
    %c0_i32 = arith.constant 0 : i32
    %0 = arith.cmpi eq, %arg1, %c0_i32 : i32
    %1 = arith.extui %0 : i1 to i32
    %c0_i32_0 = arith.constant 0 : i32
    %2 = arith.cmpi ne, %1, %c0_i32_0 : i32
    scf.if %2 {
      %cst_146 = arith.constant 0.000000e+00 : f32
      %256 = vector.broadcast %cst_146 : f32 to vector<16x128xf32>
      %c0_147 = arith.constant 0 : index
      %c0_148 = arith.constant 0 : index
      %257 = vector.load %arg6[%c0_147, %c0_148] : memref<16x128xf32, #tpu.memory_space<vmem>>, vector<16x128xf32>
      tpu.vector_store %arg6[%c0_147, %c0_148], %256 {strides = array<i32>} : memref<16x128xf32, #tpu.memory_space<vmem>>, vector<16x128xf32>,
      %cst_149 = arith.constant 0.000000e+00 : bf16
      %258 = vector.broadcast %cst_149 : bf16 to vector<16x128xbf16>
      %c0_150 = arith.constant 0 : index
      %c0_151 = arith.constant 0 : index
      %259 = vector.load %arg7[%c0_150, %c0_151] : memref<16x128xbf16, #tpu.memory_space<vmem>>, vector<16x128xbf16>
      tpu.vector_store %arg7[%c0_150, %c0_151], %258 {strides = array<i32>} : memref<16x128xbf16, #tpu.memory_space<vmem>>, vector<16x128xbf16>,
      %cst_152 = arith.constant 0.000000e+00 : f32
      %260 = vector.broadcast %cst_152 : f32 to vector<16x128xf32>
      %c0_153 = arith.constant 0 : index
      %c0_154 = arith.constant 0 : index
      %261 = vector.load %arg8[%c0_153, %c0_154] : memref<16x128xf32, #tpu.memory_space<vmem>>, vector<16x128xf32>
      tpu.vector_store %arg8[%c0_153, %c0_154], %260 {strides = array<i32>} : memref<16x128xf32, #tpu.memory_space<vmem>>, vector<16x128xf32>,
      %cst_155 = arith.constant 0.000000e+00 : f32
      %262 = vector.broadcast %cst_155 : f32 to vector<16x128xf32>
      %c0_156 = arith.constant 0 : index
      %c0_157 = arith.constant 0 : index
      %263 = vector.load %arg5[%c0_156, %c0_157] : memref<16x128xf32, #tpu.memory_space<vmem>>, vector<16x128xf32>
      tpu.vector_store %arg5[%c0_156, %c0_157], %262 {strides = array<i32>} : memref<16x128xf32, #tpu.memory_space<vmem>>, vector<16x128xf32>,
    } else {
    }
    %c0 = arith.constant 0 : index
    %c0_1 = arith.constant 0 : index
    %3 = vector.load %arg3[%c0, %c0_1] : memref<128x128xbf16, #tpu.memory_space<vmem>>, vector<128x128xbf16>
    %c0_2 = arith.constant 0 : index
    %c0_3 = arith.constant 0 : index
    %4 = vector.load %arg6[%c0_2, %c0_3] : memref<16x128xf32, #tpu.memory_space<vmem>>, vector<16x128xf32>
    %c0_4 = arith.constant 0 : index
    %c0_5 = arith.constant 0 : index
    %5 = vector.load %arg7[%c0_4, %c0_5] : memref<16x128xbf16, #tpu.memory_space<vmem>>, vector<16x128xbf16>
    %c0_i32_6 = arith.constant 0 : i32
    %6 = arith.index_cast %c0_i32_6 : i32 to index
    %c0_7 = arith.constant 0 : index
    %c0_8 = arith.constant 0 : index
    %7 = vector.load %arg2[%6, %c0_7, %c0_8] : memref<8x16x128xbf16, #tpu.memory_space<vmem>>, vector<1x16x128xbf16>
    %8 = vector.shape_cast %7 : vector<1x16x128xbf16> to vector<16x128xbf16>
    %9 = arith.extf %8 : vector<16x128xbf16> to vector<16x128xf32>
    %cst = arith.constant dense<0.000000e+00> : vector<16x128xf32>
    %10 = tpu.matmul %5, %3, %cst {dimension_numbers = #tpu.dot_dimension_numbers<[1], [0], [0], [1], [0, 0, 1, 1], [], []>} : vector<16x128xbf16>, vector<128x128xbf16>, vector<16x128xf32> -> vector<16x128xf32>
    %11 = arith.addf %9, %10 : vector<16x128xf32>
    %cst_9 = arith.constant 5.000000e-01 : f32
    %12 = vector.broadcast %cst_9 : f32 to vector<16x128xf32>
    %13 = arith.mulf %12, %4 : vector<16x128xf32>
    %cst_10 = arith.constant 1.000000e+00 : bf16
    %14 = vector.broadcast %cst_10 : bf16 to vector<16x128xbf16>
    %15 = arith.subf %14, %5 : vector<16x128xbf16>
    %16 = arith.extf %15 : vector<16x128xbf16> to vector<16x128xf32>
    %17 = arith.mulf %13, %16 : vector<16x128xf32>
    %18 = arith.addf %17, %11 : vector<16x128xf32>
    %cst_11 = arith.constant 5.000000e-01 : f32
    %19 = vector.broadcast %cst_11 : f32 to vector<16x128xf32>
    %20 = arith.cmpf oge, %18, %19 : vector<16x128xf32>
    %21 = arith.extui %20 : vector<16x128xi1> to vector<16x128xi32>
    %22 = arith.sitofp %21 : vector<16x128xi32> to vector<16x128xf32>
    %23 = arith.truncf %22 : vector<16x128xf32> to vector<16x128xbf16>
    %24 = arith.index_cast %c0_i32_6 : i32 to index
    %c0_12 = arith.constant 0 : index
    %c0_13 = arith.constant 0 : index
    %25 = vector.load %arg4[%24, %c0_12, %c0_13] : memref<8x16x128xbf16, #tpu.memory_space<vmem>>, vector<1x16x128xbf16>
    %26 = vector.shape_cast %25 : vector<1x16x128xbf16> to vector<16x128xbf16>
    %27 = vector.shape_cast %23 : vector<16x128xbf16> to vector<1x16x128xbf16>
    tpu.vector_store %arg4[%24, %c0_12, %c0_13], %27 {strides = array<i32>} : memref<8x16x128xbf16, #tpu.memory_space<vmem>>, vector<1x16x128xbf16>,
    %c0_14 = arith.constant 0 : index
    %c0_15 = arith.constant 0 : index
    %28 = vector.load %arg8[%c0_14, %c0_15] : memref<16x128xf32, #tpu.memory_space<vmem>>, vector<16x128xf32>
    %cst_16 = arith.constant 8.000000e-01 : f32
    %29 = vector.broadcast %cst_16 : f32 to vector<16x128xf32>
    %30 = arith.mulf %29, %28 : vector<16x128xf32>
    %31 = arith.extf %23 : vector<16x128xbf16> to vector<16x128xf32>
    %32 = arith.addf %30, %31 : vector<16x128xf32>
    %c0_17 = arith.constant 0 : index
    %c0_18 = arith.constant 0 : index
    %33 = vector.load %arg8[%c0_17, %c0_18] : memref<16x128xf32, #tpu.memory_space<vmem>>, vector<16x128xf32>
    tpu.vector_store %arg8[%c0_17, %c0_18], %32 {strides = array<i32>} : memref<16x128xf32, #tpu.memory_space<vmem>>, vector<16x128xf32>,
    %c0_19 = arith.constant 0 : index
    %c0_20 = arith.constant 0 : index
    %34 = vector.load %arg5[%c0_19, %c0_20] : memref<16x128xf32, #tpu.memory_space<vmem>>, vector<16x128xf32>
    %35 = arith.addf %34, %32 : vector<16x128xf32>
    %c0_21 = arith.constant 0 : index
    %c0_22 = arith.constant 0 : index
    %36 = vector.load %arg5[%c0_21, %c0_22] : memref<16x128xf32, #tpu.memory_space<vmem>>, vector<16x128xf32>
    tpu.vector_store %arg5[%c0_21, %c0_22], %35 {strides = array<i32>} : memref<16x128xf32, #tpu.memory_space<vmem>>, vector<16x128xf32>,
    %c1_i32 = arith.constant 1 : i32
    %37 = arith.index_cast %c1_i32 : i32 to index
    %c0_23 = arith.constant 0 : index
    %c0_24 = arith.constant 0 : index
    %38 = vector.load %arg2[%37, %c0_23, %c0_24] : memref<8x16x128xbf16, #tpu.memory_space<vmem>>, vector<1x16x128xbf16>
    %39 = vector.shape_cast %38 : vector<1x16x128xbf16> to vector<16x128xbf16>
    %40 = arith.extf %39 : vector<16x128xbf16> to vector<16x128xf32>
    %cst_25 = arith.constant dense<0.000000e+00> : vector<16x128xf32>
    %41 = tpu.matmul %23, %3, %cst_25 {dimension_numbers = #tpu.dot_dimension_numbers<[1], [0], [0], [1], [0, 0, 1, 1], [], []>} : vector<16x128xbf16>, vector<128x128xbf16>, vector<16x128xf32> -> vector<16x128xf32>
    %42 = arith.addf %40, %41 : vector<16x128xf32>
    %cst_26 = arith.constant 5.000000e-01 : f32
    %43 = vector.broadcast %cst_26 : f32 to vector<16x128xf32>
    %44 = arith.mulf %43, %18 : vector<16x128xf32>
    %cst_27 = arith.constant 1.000000e+00 : bf16
    %45 = vector.broadcast %cst_27 : bf16 to vector<16x128xbf16>
    %46 = arith.subf %45, %23 : vector<16x128xbf16>
    %47 = arith.extf %46 : vector<16x128xbf16> to vector<16x128xf32>
    %48 = arith.mulf %44, %47 : vector<16x128xf32>
    %49 = arith.addf %48, %42 : vector<16x128xf32>
    %cst_28 = arith.constant 5.000000e-01 : f32
    %50 = vector.broadcast %cst_28 : f32 to vector<16x128xf32>
    %51 = arith.cmpf oge, %49, %50 : vector<16x128xf32>
    %52 = arith.extui %51 : vector<16x128xi1> to vector<16x128xi32>
    %53 = arith.sitofp %52 : vector<16x128xi32> to vector<16x128xf32>
    %54 = arith.truncf %53 : vector<16x128xf32> to vector<16x128xbf16>
    %55 = arith.index_cast %c1_i32 : i32 to index
    %c0_29 = arith.constant 0 : index
    %c0_30 = arith.constant 0 : index
    %56 = vector.load %arg4[%55, %c0_29, %c0_30] : memref<8x16x128xbf16, #tpu.memory_space<vmem>>, vector<1x16x128xbf16>
    %57 = vector.shape_cast %56 : vector<1x16x128xbf16> to vector<16x128xbf16>
    %58 = vector.shape_cast %54 : vector<16x128xbf16> to vector<1x16x128xbf16>
    tpu.vector_store %arg4[%55, %c0_29, %c0_30], %58 {strides = array<i32>} : memref<8x16x128xbf16, #tpu.memory_space<vmem>>, vector<1x16x128xbf16>,
    %c0_31 = arith.constant 0 : index
    %c0_32 = arith.constant 0 : index
    %59 = vector.load %arg8[%c0_31, %c0_32] : memref<16x128xf32, #tpu.memory_space<vmem>>, vector<16x128xf32>
    %cst_33 = arith.constant 8.000000e-01 : f32
    %60 = vector.broadcast %cst_33 : f32 to vector<16x128xf32>
    %61 = arith.mulf %60, %59 : vector<16x128xf32>
    %62 = arith.extf %54 : vector<16x128xbf16> to vector<16x128xf32>
    %63 = arith.addf %61, %62 : vector<16x128xf32>
    %c0_34 = arith.constant 0 : index
    %c0_35 = arith.constant 0 : index
    %64 = vector.load %arg8[%c0_34, %c0_35] : memref<16x128xf32, #tpu.memory_space<vmem>>, vector<16x128xf32>
    tpu.vector_store %arg8[%c0_34, %c0_35], %63 {strides = array<i32>} : memref<16x128xf32, #tpu.memory_space<vmem>>, vector<16x128xf32>,
    %c0_36 = arith.constant 0 : index
    %c0_37 = arith.constant 0 : index
    %65 = vector.load %arg5[%c0_36, %c0_37] : memref<16x128xf32, #tpu.memory_space<vmem>>, vector<16x128xf32>
    %66 = arith.addf %65, %63 : vector<16x128xf32>
    %c0_38 = arith.constant 0 : index
    %c0_39 = arith.constant 0 : index
    %67 = vector.load %arg5[%c0_38, %c0_39] : memref<16x128xf32, #tpu.memory_space<vmem>>, vector<16x128xf32>
    tpu.vector_store %arg5[%c0_38, %c0_39], %66 {strides = array<i32>} : memref<16x128xf32, #tpu.memory_space<vmem>>, vector<16x128xf32>,
    %c2_i32 = arith.constant 2 : i32
    %68 = arith.index_cast %c2_i32 : i32 to index
    %c0_40 = arith.constant 0 : index
    %c0_41 = arith.constant 0 : index
    %69 = vector.load %arg2[%68, %c0_40, %c0_41] : memref<8x16x128xbf16, #tpu.memory_space<vmem>>, vector<1x16x128xbf16>
    %70 = vector.shape_cast %69 : vector<1x16x128xbf16> to vector<16x128xbf16>
    %71 = arith.extf %70 : vector<16x128xbf16> to vector<16x128xf32>
    %cst_42 = arith.constant dense<0.000000e+00> : vector<16x128xf32>
    %72 = tpu.matmul %54, %3, %cst_42 {dimension_numbers = #tpu.dot_dimension_numbers<[1], [0], [0], [1], [0, 0, 1, 1], [], []>} : vector<16x128xbf16>, vector<128x128xbf16>, vector<16x128xf32> -> vector<16x128xf32>
    %73 = arith.addf %71, %72 : vector<16x128xf32>
    %cst_43 = arith.constant 5.000000e-01 : f32
    %74 = vector.broadcast %cst_43 : f32 to vector<16x128xf32>
    %75 = arith.mulf %74, %49 : vector<16x128xf32>
    %cst_44 = arith.constant 1.000000e+00 : bf16
    %76 = vector.broadcast %cst_44 : bf16 to vector<16x128xbf16>
    %77 = arith.subf %76, %54 : vector<16x128xbf16>
    %78 = arith.extf %77 : vector<16x128xbf16> to vector<16x128xf32>
    %79 = arith.mulf %75, %78 : vector<16x128xf32>
    %80 = arith.addf %79, %73 : vector<16x128xf32>
    %cst_45 = arith.constant 5.000000e-01 : f32
    %81 = vector.broadcast %cst_45 : f32 to vector<16x128xf32>
    %82 = arith.cmpf oge, %80, %81 : vector<16x128xf32>
    %83 = arith.extui %82 : vector<16x128xi1> to vector<16x128xi32>
    %84 = arith.sitofp %83 : vector<16x128xi32> to vector<16x128xf32>
    %85 = arith.truncf %84 : vector<16x128xf32> to vector<16x128xbf16>
    %86 = arith.index_cast %c2_i32 : i32 to index
    %c0_46 = arith.constant 0 : index
    %c0_47 = arith.constant 0 : index
    %87 = vector.load %arg4[%86, %c0_46, %c0_47] : memref<8x16x128xbf16, #tpu.memory_space<vmem>>, vector<1x16x128xbf16>
    %88 = vector.shape_cast %87 : vector<1x16x128xbf16> to vector<16x128xbf16>
    %89 = vector.shape_cast %85 : vector<16x128xbf16> to vector<1x16x128xbf16>
    tpu.vector_store %arg4[%86, %c0_46, %c0_47], %89 {strides = array<i32>} : memref<8x16x128xbf16, #tpu.memory_space<vmem>>, vector<1x16x128xbf16>,
    %c0_48 = arith.constant 0 : index
    %c0_49 = arith.constant 0 : index
    %90 = vector.load %arg8[%c0_48, %c0_49] : memref<16x128xf32, #tpu.memory_space<vmem>>, vector<16x128xf32>
    %cst_50 = arith.constant 8.000000e-01 : f32
    %91 = vector.broadcast %cst_50 : f32 to vector<16x128xf32>
    %92 = arith.mulf %91, %90 : vector<16x128xf32>
    %93 = arith.extf %85 : vector<16x128xbf16> to vector<16x128xf32>
    %94 = arith.addf %92, %93 : vector<16x128xf32>
    %c0_51 = arith.constant 0 : index
    %c0_52 = arith.constant 0 : index
    %95 = vector.load %arg8[%c0_51, %c0_52] : memref<16x128xf32, #tpu.memory_space<vmem>>, vector<16x128xf32>
    tpu.vector_store %arg8[%c0_51, %c0_52], %94 {strides = array<i32>} : memref<16x128xf32, #tpu.memory_space<vmem>>, vector<16x128xf32>,
    %c0_53 = arith.constant 0 : index
    %c0_54 = arith.constant 0 : index
    %96 = vector.load %arg5[%c0_53, %c0_54] : memref<16x128xf32, #tpu.memory_space<vmem>>, vector<16x128xf32>
    %97 = arith.addf %96, %94 : vector<16x128xf32>
    %c0_55 = arith.constant 0 : index
    %c0_56 = arith.constant 0 : index
    %98 = vector.load %arg5[%c0_55, %c0_56] : memref<16x128xf32, #tpu.memory_space<vmem>>, vector<16x128xf32>
    tpu.vector_store %arg5[%c0_55, %c0_56], %97 {strides = array<i32>} : memref<16x128xf32, #tpu.memory_space<vmem>>, vector<16x128xf32>,
    %c3_i32 = arith.constant 3 : i32
    %99 = arith.index_cast %c3_i32 : i32 to index
    %c0_57 = arith.constant 0 : index
    %c0_58 = arith.constant 0 : index
    %100 = vector.load %arg2[%99, %c0_57, %c0_58] : memref<8x16x128xbf16, #tpu.memory_space<vmem>>, vector<1x16x128xbf16>
    %101 = vector.shape_cast %100 : vector<1x16x128xbf16> to vector<16x128xbf16>
    %102 = arith.extf %101 : vector<16x128xbf16> to vector<16x128xf32>
    %cst_59 = arith.constant dense<0.000000e+00> : vector<16x128xf32>
    %103 = tpu.matmul %85, %3, %cst_59 {dimension_numbers = #tpu.dot_dimension_numbers<[1], [0], [0], [1], [0, 0, 1, 1], [], []>} : vector<16x128xbf16>, vector<128x128xbf16>, vector<16x128xf32> -> vector<16x128xf32>
    %104 = arith.addf %102, %103 : vector<16x128xf32>
    %cst_60 = arith.constant 5.000000e-01 : f32
    %105 = vector.broadcast %cst_60 : f32 to vector<16x128xf32>
    %106 = arith.mulf %105, %80 : vector<16x128xf32>
    %cst_61 = arith.constant 1.000000e+00 : bf16
    %107 = vector.broadcast %cst_61 : bf16 to vector<16x128xbf16>
    %108 = arith.subf %107, %85 : vector<16x128xbf16>
    %109 = arith.extf %108 : vector<16x128xbf16> to vector<16x128xf32>
    %110 = arith.mulf %106, %109 : vector<16x128xf32>
    %111 = arith.addf %110, %104 : vector<16x128xf32>
    %cst_62 = arith.constant 5.000000e-01 : f32
    %112 = vector.broadcast %cst_62 : f32 to vector<16x128xf32>
    %113 = arith.cmpf oge, %111, %112 : vector<16x128xf32>
    %114 = arith.extui %113 : vector<16x128xi1> to vector<16x128xi32>
    %115 = arith.sitofp %114 : vector<16x128xi32> to vector<16x128xf32>
    %116 = arith.truncf %115 : vector<16x128xf32> to vector<16x128xbf16>
    %117 = arith.index_cast %c3_i32 : i32 to index
    %c0_63 = arith.constant 0 : index
    %c0_64 = arith.constant 0 : index
    %118 = vector.load %arg4[%117, %c0_63, %c0_64] : memref<8x16x128xbf16, #tpu.memory_space<vmem>>, vector<1x16x128xbf16>
    %119 = vector.shape_cast %118 : vector<1x16x128xbf16> to vector<16x128xbf16>
    %120 = vector.shape_cast %116 : vector<16x128xbf16> to vector<1x16x128xbf16>
    tpu.vector_store %arg4[%117, %c0_63, %c0_64], %120 {strides = array<i32>} : memref<8x16x128xbf16, #tpu.memory_space<vmem>>, vector<1x16x128xbf16>,
    %c0_65 = arith.constant 0 : index
    %c0_66 = arith.constant 0 : index
    %121 = vector.load %arg8[%c0_65, %c0_66] : memref<16x128xf32, #tpu.memory_space<vmem>>, vector<16x128xf32>
    %cst_67 = arith.constant 8.000000e-01 : f32
    %122 = vector.broadcast %cst_67 : f32 to vector<16x128xf32>
    %123 = arith.mulf %122, %121 : vector<16x128xf32>
    %124 = arith.extf %116 : vector<16x128xbf16> to vector<16x128xf32>
    %125 = arith.addf %123, %124 : vector<16x128xf32>
    %c0_68 = arith.constant 0 : index
    %c0_69 = arith.constant 0 : index
    %126 = vector.load %arg8[%c0_68, %c0_69] : memref<16x128xf32, #tpu.memory_space<vmem>>, vector<16x128xf32>
    tpu.vector_store %arg8[%c0_68, %c0_69], %125 {strides = array<i32>} : memref<16x128xf32, #tpu.memory_space<vmem>>, vector<16x128xf32>,
    %c0_70 = arith.constant 0 : index
    %c0_71 = arith.constant 0 : index
    %127 = vector.load %arg5[%c0_70, %c0_71] : memref<16x128xf32, #tpu.memory_space<vmem>>, vector<16x128xf32>
    %128 = arith.addf %127, %125 : vector<16x128xf32>
    %c0_72 = arith.constant 0 : index
    %c0_73 = arith.constant 0 : index
    %129 = vector.load %arg5[%c0_72, %c0_73] : memref<16x128xf32, #tpu.memory_space<vmem>>, vector<16x128xf32>
    tpu.vector_store %arg5[%c0_72, %c0_73], %128 {strides = array<i32>} : memref<16x128xf32, #tpu.memory_space<vmem>>, vector<16x128xf32>,
    %c4_i32 = arith.constant 4 : i32
    %130 = arith.index_cast %c4_i32 : i32 to index
    %c0_74 = arith.constant 0 : index
    %c0_75 = arith.constant 0 : index
    %131 = vector.load %arg2[%130, %c0_74, %c0_75] : memref<8x16x128xbf16, #tpu.memory_space<vmem>>, vector<1x16x128xbf16>
    %132 = vector.shape_cast %131 : vector<1x16x128xbf16> to vector<16x128xbf16>
    %133 = arith.extf %132 : vector<16x128xbf16> to vector<16x128xf32>
    %cst_76 = arith.constant dense<0.000000e+00> : vector<16x128xf32>
    %134 = tpu.matmul %116, %3, %cst_76 {dimension_numbers = #tpu.dot_dimension_numbers<[1], [0], [0], [1], [0, 0, 1, 1], [], []>} : vector<16x128xbf16>, vector<128x128xbf16>, vector<16x128xf32> -> vector<16x128xf32>
    %135 = arith.addf %133, %134 : vector<16x128xf32>
    %cst_77 = arith.constant 5.000000e-01 : f32
    %136 = vector.broadcast %cst_77 : f32 to vector<16x128xf32>
    %137 = arith.mulf %136, %111 : vector<16x128xf32>
    %cst_78 = arith.constant 1.000000e+00 : bf16
    %138 = vector.broadcast %cst_78 : bf16 to vector<16x128xbf16>
    %139 = arith.subf %138, %116 : vector<16x128xbf16>
    %140 = arith.extf %139 : vector<16x128xbf16> to vector<16x128xf32>
    %141 = arith.mulf %137, %140 : vector<16x128xf32>
    %142 = arith.addf %141, %135 : vector<16x128xf32>
    %cst_79 = arith.constant 5.000000e-01 : f32
    %143 = vector.broadcast %cst_79 : f32 to vector<16x128xf32>
    %144 = arith.cmpf oge, %142, %143 : vector<16x128xf32>
    %145 = arith.extui %144 : vector<16x128xi1> to vector<16x128xi32>
    %146 = arith.sitofp %145 : vector<16x128xi32> to vector<16x128xf32>
    %147 = arith.truncf %146 : vector<16x128xf32> to vector<16x128xbf16>
    %148 = arith.index_cast %c4_i32 : i32 to index
    %c0_80 = arith.constant 0 : index
    %c0_81 = arith.constant 0 : index
    %149 = vector.load %arg4[%148, %c0_80, %c0_81] : memref<8x16x128xbf16, #tpu.memory_space<vmem>>, vector<1x16x128xbf16>
    %150 = vector.shape_cast %149 : vector<1x16x128xbf16> to vector<16x128xbf16>
    %151 = vector.shape_cast %147 : vector<16x128xbf16> to vector<1x16x128xbf16>
    tpu.vector_store %arg4[%148, %c0_80, %c0_81], %151 {strides = array<i32>} : memref<8x16x128xbf16, #tpu.memory_space<vmem>>, vector<1x16x128xbf16>,
    %c0_82 = arith.constant 0 : index
    %c0_83 = arith.constant 0 : index
    %152 = vector.load %arg8[%c0_82, %c0_83] : memref<16x128xf32, #tpu.memory_space<vmem>>, vector<16x128xf32>
    %cst_84 = arith.constant 8.000000e-01 : f32
    %153 = vector.broadcast %cst_84 : f32 to vector<16x128xf32>
    %154 = arith.mulf %153, %152 : vector<16x128xf32>
    %155 = arith.extf %147 : vector<16x128xbf16> to vector<16x128xf32>
    %156 = arith.addf %154, %155 : vector<16x128xf32>
    %c0_85 = arith.constant 0 : index
    %c0_86 = arith.constant 0 : index
    %157 = vector.load %arg8[%c0_85, %c0_86] : memref<16x128xf32, #tpu.memory_space<vmem>>, vector<16x128xf32>
    tpu.vector_store %arg8[%c0_85, %c0_86], %156 {strides = array<i32>} : memref<16x128xf32, #tpu.memory_space<vmem>>, vector<16x128xf32>,
    %c0_87 = arith.constant 0 : index
    %c0_88 = arith.constant 0 : index
    %158 = vector.load %arg5[%c0_87, %c0_88] : memref<16x128xf32, #tpu.memory_space<vmem>>, vector<16x128xf32>
    %159 = arith.addf %158, %156 : vector<16x128xf32>
    %c0_89 = arith.constant 0 : index
    %c0_90 = arith.constant 0 : index
    %160 = vector.load %arg5[%c0_89, %c0_90] : memref<16x128xf32, #tpu.memory_space<vmem>>, vector<16x128xf32>
    tpu.vector_store %arg5[%c0_89, %c0_90], %159 {strides = array<i32>} : memref<16x128xf32, #tpu.memory_space<vmem>>, vector<16x128xf32>,
    %c5_i32 = arith.constant 5 : i32
    %161 = arith.index_cast %c5_i32 : i32 to index
    %c0_91 = arith.constant 0 : index
    %c0_92 = arith.constant 0 : index
    %162 = vector.load %arg2[%161, %c0_91, %c0_92] : memref<8x16x128xbf16, #tpu.memory_space<vmem>>, vector<1x16x128xbf16>
    %163 = vector.shape_cast %162 : vector<1x16x128xbf16> to vector<16x128xbf16>
    %164 = arith.extf %163 : vector<16x128xbf16> to vector<16x128xf32>
    %cst_93 = arith.constant dense<0.000000e+00> : vector<16x128xf32>
    %165 = tpu.matmul %147, %3, %cst_93 {dimension_numbers = #tpu.dot_dimension_numbers<[1], [0], [0], [1], [0, 0, 1, 1], [], []>} : vector<16x128xbf16>, vector<128x128xbf16>, vector<16x128xf32> -> vector<16x128xf32>
    %166 = arith.addf %164, %165 : vector<16x128xf32>
    %cst_94 = arith.constant 5.000000e-01 : f32
    %167 = vector.broadcast %cst_94 : f32 to vector<16x128xf32>
    %168 = arith.mulf %167, %142 : vector<16x128xf32>
    %cst_95 = arith.constant 1.000000e+00 : bf16
    %169 = vector.broadcast %cst_95 : bf16 to vector<16x128xbf16>
    %170 = arith.subf %169, %147 : vector<16x128xbf16>
    %171 = arith.extf %170 : vector<16x128xbf16> to vector<16x128xf32>
    %172 = arith.mulf %168, %171 : vector<16x128xf32>
    %173 = arith.addf %172, %166 : vector<16x128xf32>
    %cst_96 = arith.constant 5.000000e-01 : f32
    %174 = vector.broadcast %cst_96 : f32 to vector<16x128xf32>
    %175 = arith.cmpf oge, %173, %174 : vector<16x128xf32>
    %176 = arith.extui %175 : vector<16x128xi1> to vector<16x128xi32>
    %177 = arith.sitofp %176 : vector<16x128xi32> to vector<16x128xf32>
    %178 = arith.truncf %177 : vector<16x128xf32> to vector<16x128xbf16>
    %179 = arith.index_cast %c5_i32 : i32 to index
    %c0_97 = arith.constant 0 : index
    %c0_98 = arith.constant 0 : index
    %180 = vector.load %arg4[%179, %c0_97, %c0_98] : memref<8x16x128xbf16, #tpu.memory_space<vmem>>, vector<1x16x128xbf16>
    %181 = vector.shape_cast %180 : vector<1x16x128xbf16> to vector<16x128xbf16>
    %182 = vector.shape_cast %178 : vector<16x128xbf16> to vector<1x16x128xbf16>
    tpu.vector_store %arg4[%179, %c0_97, %c0_98], %182 {strides = array<i32>} : memref<8x16x128xbf16, #tpu.memory_space<vmem>>, vector<1x16x128xbf16>,
    %c0_99 = arith.constant 0 : index
    %c0_100 = arith.constant 0 : index
    %183 = vector.load %arg8[%c0_99, %c0_100] : memref<16x128xf32, #tpu.memory_space<vmem>>, vector<16x128xf32>
    %cst_101 = arith.constant 8.000000e-01 : f32
    %184 = vector.broadcast %cst_101 : f32 to vector<16x128xf32>
    %185 = arith.mulf %184, %183 : vector<16x128xf32>
    %186 = arith.extf %178 : vector<16x128xbf16> to vector<16x128xf32>
    %187 = arith.addf %185, %186 : vector<16x128xf32>
    %c0_102 = arith.constant 0 : index
    %c0_103 = arith.constant 0 : index
    %188 = vector.load %arg8[%c0_102, %c0_103] : memref<16x128xf32, #tpu.memory_space<vmem>>, vector<16x128xf32>
    tpu.vector_store %arg8[%c0_102, %c0_103], %187 {strides = array<i32>} : memref<16x128xf32, #tpu.memory_space<vmem>>, vector<16x128xf32>,
    %c0_104 = arith.constant 0 : index
    %c0_105 = arith.constant 0 : index
    %189 = vector.load %arg5[%c0_104, %c0_105] : memref<16x128xf32, #tpu.memory_space<vmem>>, vector<16x128xf32>
    %190 = arith.addf %189, %187 : vector<16x128xf32>
    %c0_106 = arith.constant 0 : index
    %c0_107 = arith.constant 0 : index
    %191 = vector.load %arg5[%c0_106, %c0_107] : memref<16x128xf32, #tpu.memory_space<vmem>>, vector<16x128xf32>
    tpu.vector_store %arg5[%c0_106, %c0_107], %190 {strides = array<i32>} : memref<16x128xf32, #tpu.memory_space<vmem>>, vector<16x128xf32>,
    %c6_i32 = arith.constant 6 : i32
    %192 = arith.index_cast %c6_i32 : i32 to index
    %c0_108 = arith.constant 0 : index
    %c0_109 = arith.constant 0 : index
    %193 = vector.load %arg2[%192, %c0_108, %c0_109] : memref<8x16x128xbf16, #tpu.memory_space<vmem>>, vector<1x16x128xbf16>
    %194 = vector.shape_cast %193 : vector<1x16x128xbf16> to vector<16x128xbf16>
    %195 = arith.extf %194 : vector<16x128xbf16> to vector<16x128xf32>
    %cst_110 = arith.constant dense<0.000000e+00> : vector<16x128xf32>
    %196 = tpu.matmul %178, %3, %cst_110 {dimension_numbers = #tpu.dot_dimension_numbers<[1], [0], [0], [1], [0, 0, 1, 1], [], []>} : vector<16x128xbf16>, vector<128x128xbf16>, vector<16x128xf32> -> vector<16x128xf32>
    %197 = arith.addf %195, %196 : vector<16x128xf32>
    %cst_111 = arith.constant 5.000000e-01 : f32
    %198 = vector.broadcast %cst_111 : f32 to vector<16x128xf32>
    %199 = arith.mulf %198, %173 : vector<16x128xf32>
    %cst_112 = arith.constant 1.000000e+00 : bf16
    %200 = vector.broadcast %cst_112 : bf16 to vector<16x128xbf16>
    %201 = arith.subf %200, %178 : vector<16x128xbf16>
    %202 = arith.extf %201 : vector<16x128xbf16> to vector<16x128xf32>
    %203 = arith.mulf %199, %202 : vector<16x128xf32>
    %204 = arith.addf %203, %197 : vector<16x128xf32>
    %cst_113 = arith.constant 5.000000e-01 : f32
    %205 = vector.broadcast %cst_113 : f32 to vector<16x128xf32>
    %206 = arith.cmpf oge, %204, %205 : vector<16x128xf32>
    %207 = arith.extui %206 : vector<16x128xi1> to vector<16x128xi32>
    %208 = arith.sitofp %207 : vector<16x128xi32> to vector<16x128xf32>
    %209 = arith.truncf %208 : vector<16x128xf32> to vector<16x128xbf16>
    %210 = arith.index_cast %c6_i32 : i32 to index
    %c0_114 = arith.constant 0 : index
    %c0_115 = arith.constant 0 : index
    %211 = vector.load %arg4[%210, %c0_114, %c0_115] : memref<8x16x128xbf16, #tpu.memory_space<vmem>>, vector<1x16x128xbf16>
    %212 = vector.shape_cast %211 : vector<1x16x128xbf16> to vector<16x128xbf16>
    %213 = vector.shape_cast %209 : vector<16x128xbf16> to vector<1x16x128xbf16>
    tpu.vector_store %arg4[%210, %c0_114, %c0_115], %213 {strides = array<i32>} : memref<8x16x128xbf16, #tpu.memory_space<vmem>>, vector<1x16x128xbf16>,
    %c0_116 = arith.constant 0 : index
    %c0_117 = arith.constant 0 : index
    %214 = vector.load %arg8[%c0_116, %c0_117] : memref<16x128xf32, #tpu.memory_space<vmem>>, vector<16x128xf32>
    %cst_118 = arith.constant 8.000000e-01 : f32
    %215 = vector.broadcast %cst_118 : f32 to vector<16x128xf32>
    %216 = arith.mulf %215, %214 : vector<16x128xf32>
    %217 = arith.extf %209 : vector<16x128xbf16> to vector<16x128xf32>
    %218 = arith.addf %216, %217 : vector<16x128xf32>
    %c0_119 = arith.constant 0 : index
    %c0_120 = arith.constant 0 : index
    %219 = vector.load %arg8[%c0_119, %c0_120] : memref<16x128xf32, #tpu.memory_space<vmem>>, vector<16x128xf32>
    tpu.vector_store %arg8[%c0_119, %c0_120], %218 {strides = array<i32>} : memref<16x128xf32, #tpu.memory_space<vmem>>, vector<16x128xf32>,
    %c0_121 = arith.constant 0 : index
    %c0_122 = arith.constant 0 : index
    %220 = vector.load %arg5[%c0_121, %c0_122] : memref<16x128xf32, #tpu.memory_space<vmem>>, vector<16x128xf32>
    %221 = arith.addf %220, %218 : vector<16x128xf32>
    %c0_123 = arith.constant 0 : index
    %c0_124 = arith.constant 0 : index
    %222 = vector.load %arg5[%c0_123, %c0_124] : memref<16x128xf32, #tpu.memory_space<vmem>>, vector<16x128xf32>
    tpu.vector_store %arg5[%c0_123, %c0_124], %221 {strides = array<i32>} : memref<16x128xf32, #tpu.memory_space<vmem>>, vector<16x128xf32>,
    %c7_i32 = arith.constant 7 : i32
    %223 = arith.index_cast %c7_i32 : i32 to index
    %c0_125 = arith.constant 0 : index
    %c0_126 = arith.constant 0 : index
    %224 = vector.load %arg2[%223, %c0_125, %c0_126] : memref<8x16x128xbf16, #tpu.memory_space<vmem>>, vector<1x16x128xbf16>
    %225 = vector.shape_cast %224 : vector<1x16x128xbf16> to vector<16x128xbf16>
    %226 = arith.extf %225 : vector<16x128xbf16> to vector<16x128xf32>
    %cst_127 = arith.constant dense<0.000000e+00> : vector<16x128xf32>
    %227 = tpu.matmul %209, %3, %cst_127 {dimension_numbers = #tpu.dot_dimension_numbers<[1], [0], [0], [1], [0, 0, 1, 1], [], []>} : vector<16x128xbf16>, vector<128x128xbf16>, vector<16x128xf32> -> vector<16x128xf32>
    %228 = arith.addf %226, %227 : vector<16x128xf32>
    %cst_128 = arith.constant 5.000000e-01 : f32
    %229 = vector.broadcast %cst_128 : f32 to vector<16x128xf32>
    %230 = arith.mulf %229, %204 : vector<16x128xf32>
    %cst_129 = arith.constant 1.000000e+00 : bf16
    %231 = vector.broadcast %cst_129 : bf16 to vector<16x128xbf16>
    %232 = arith.subf %231, %209 : vector<16x128xbf16>
    %233 = arith.extf %232 : vector<16x128xbf16> to vector<16x128xf32>
    %234 = arith.mulf %230, %233 : vector<16x128xf32>
    %235 = arith.addf %234, %228 : vector<16x128xf32>
    %cst_130 = arith.constant 5.000000e-01 : f32
    %236 = vector.broadcast %cst_130 : f32 to vector<16x128xf32>
    %237 = arith.cmpf oge, %235, %236 : vector<16x128xf32>
    %238 = arith.extui %237 : vector<16x128xi1> to vector<16x128xi32>
    %239 = arith.sitofp %238 : vector<16x128xi32> to vector<16x128xf32>
    %240 = arith.truncf %239 : vector<16x128xf32> to vector<16x128xbf16>
    %241 = arith.index_cast %c7_i32 : i32 to index
    %c0_131 = arith.constant 0 : index
    %c0_132 = arith.constant 0 : index
    %242 = vector.load %arg4[%241, %c0_131, %c0_132] : memref<8x16x128xbf16, #tpu.memory_space<vmem>>, vector<1x16x128xbf16>
    %243 = vector.shape_cast %242 : vector<1x16x128xbf16> to vector<16x128xbf16>
    %244 = vector.shape_cast %240 : vector<16x128xbf16> to vector<1x16x128xbf16>
    tpu.vector_store %arg4[%241, %c0_131, %c0_132], %244 {strides = array<i32>} : memref<8x16x128xbf16, #tpu.memory_space<vmem>>, vector<1x16x128xbf16>,
    %c0_133 = arith.constant 0 : index
    %c0_134 = arith.constant 0 : index
    %245 = vector.load %arg8[%c0_133, %c0_134] : memref<16x128xf32, #tpu.memory_space<vmem>>, vector<16x128xf32>
    %cst_135 = arith.constant 8.000000e-01 : f32
    %246 = vector.broadcast %cst_135 : f32 to vector<16x128xf32>
    %247 = arith.mulf %246, %245 : vector<16x128xf32>
    %248 = arith.extf %240 : vector<16x128xbf16> to vector<16x128xf32>
    %249 = arith.addf %247, %248 : vector<16x128xf32>
    %c0_136 = arith.constant 0 : index
    %c0_137 = arith.constant 0 : index
    %250 = vector.load %arg8[%c0_136, %c0_137] : memref<16x128xf32, #tpu.memory_space<vmem>>, vector<16x128xf32>
    tpu.vector_store %arg8[%c0_136, %c0_137], %249 {strides = array<i32>} : memref<16x128xf32, #tpu.memory_space<vmem>>, vector<16x128xf32>,
    %c0_138 = arith.constant 0 : index
    %c0_139 = arith.constant 0 : index
    %251 = vector.load %arg5[%c0_138, %c0_139] : memref<16x128xf32, #tpu.memory_space<vmem>>, vector<16x128xf32>
    %252 = arith.addf %251, %249 : vector<16x128xf32>
    %c0_140 = arith.constant 0 : index
    %c0_141 = arith.constant 0 : index
    %253 = vector.load %arg5[%c0_140, %c0_141] : memref<16x128xf32, #tpu.memory_space<vmem>>, vector<16x128xf32>
    tpu.vector_store %arg5[%c0_140, %c0_141], %252 {strides = array<i32>} : memref<16x128xf32, #tpu.memory_space<vmem>>, vector<16x128xf32>,
    %c8_i32 = arith.constant 8 : i32
    %c0_142 = arith.constant 0 : index
    %c0_143 = arith.constant 0 : index
    %254 = vector.load %arg6[%c0_142, %c0_143] : memref<16x128xf32, #tpu.memory_space<vmem>>, vector<16x128xf32>
    tpu.vector_store %arg6[%c0_142, %c0_143], %235 {strides = array<i32>} : memref<16x128xf32, #tpu.memory_space<vmem>>, vector<16x128xf32>,
    %c0_144 = arith.constant 0 : index
    %c0_145 = arith.constant 0 : index
    %255 = vector.load %arg7[%c0_144, %c0_145] : memref<16x128xbf16, #tpu.memory_space<vmem>>, vector<16x128xbf16>
    tpu.vector_store %arg7[%c0_144, %c0_145], %240 {strides = array<i32>} : memref<16x128xbf16, #tpu.memory_space<vmem>>, vector<16x128xbf16>,
    return
  }
  func.func @transform_0(%arg0: i32, %arg1: i32) -> (i32, i32, i32) {
    %c0_i32 = arith.constant 0 : i32
    %c0_i32_0 = arith.constant 0 : i32
    return %arg1, %arg0, %c0_i32 : i32, i32, i32
  }
  func.func @transform_1(%arg0: i32, %arg1: i32) -> (i32, i32) {
    %c0_i32 = arith.constant 0 : i32
    %c0_i32_0 = arith.constant 0 : i32
    %c0_i32_1 = arith.constant 0 : i32
    return %c0_i32, %c0_i32_0 : i32, i32
  }
  func.func @transform_2(%arg0: i32, %arg1: i32) -> (i32, i32, i32) {
    %c0_i32 = arith.constant 0 : i32
    %c0_i32_0 = arith.constant 0 : i32
    return %arg1, %arg0, %c0_i32 : i32, i32, i32
  }
  func.func @transform_3(%arg0: i32, %arg1: i32) -> (i32, i32) {
    %c0_i32 = arith.constant 0 : i32
    %c0_i32_0 = arith.constant 0 : i32
    return %arg0, %c0_i32 : i32, i32
  }
}

</mosaic_0001>

<llo_original>
// kernel: spasrnn_forward.1
$region0: #{spasrnn_forward.1}
  #allocation0 [shape = 'u32[]', space=smem, size = 0x4, offset = 0x4, fixed_abs, tag = 'smem constant byte address 0x4 - core index']
  #allocation1 [shape = 'u32[144,128]{1,0:T(1,128)}', space=vmem, size = 0x12000, scoped, tag = 'internal scratch']
  #allocation2 [shape = 'f32[16,128]{1,0:T(8,128)}', space=vmem, size = 0x2000, scoped, tag = 'scratch operand']
  #allocation3 [shape = 'bf16[16,128]{1,0:T(16,128)(2,1)}', space=vmem, size = 0x1000, scoped, tag = 'scratch operand']
  #allocation4 [shape = 'f32[16,128]{1,0:T(8,128)}', space=vmem, size = 0x2000, scoped, tag = 'scratch operand']
  #allocation8 [shape = 's32[]', space=sflag, size = 0x4, offset = 0, fixed_abs, tag = 'sflag constant byte address 0x0 - dummy sync flag']
  %s0 = inlined_call_operand.vmem [shape: bf16[32,32,128], index: 0, kind: input, shape index: {}]
  %s1 = inlined_call_operand.vmem [shape: bf16[128,128], index: 1, kind: input, shape index: {}]
  %s2 = inlined_call_operand.hbm [shape: bf16[32,32,128], index: 2, kind: output, shape index: {0}]
  %s3 = inlined_call_operand.vmem [shape: f32[32,128], index: 3, kind: output, shape index: {1}]
  %4 = xla_tuple %s2, %s3
  %s5 = sld [smem:[#allocation0]]
  $region94: #{spasrnn_forward.1} parent=0
    _
  %s7 = ssub.s32 1, %s5
  %s8 = scalar_select 0, %s7, %s5
  $region1: #{spasrnn_forward.1} parent=0
    #allocation5 [shape = 'u8[65536]{0}', space=vmem, size = 0x10000, scoped, tag = 'input window, operand 0']
    #allocation6 [shape = 'u8[65536]{0}', space=vmem, size = 0x10000, scoped, tag = 'output window, operand 0']
    #allocation7 [shape = 's32[2]{0}', space=sflag, size = 0x8, scoped, tag = 'scoped memory for spasrnn_forward.1']
    %9 = vsyncpa [#allocation7], 0
    %s10 = scalar_lea.sflag [#allocation7], 1
    %11 = vsyncpa %s10, 0
    loop: start=0, step=1, limit=10
    $region2: #{spasrnn_forward.1} parent=1 // loop_pre_header
      _
    $region3: #{spasrnn_forward.1} parent=1 // loop_header
      %s13 = sphi 0, %s17
      %p14 = scmp.ge.s32.totalorder %s13, 10
      %s20 = sphi 0, %s32
      %s21 = sphi 0, %s28
      %s22 = sphi 0, %s20
      %s23 = sphi 0, %s21
      %s24 = sphi 0, %s22
      %s25 = sphi 0, %s23
      %s37 = sphi 0, %s39
      %s40 = sphi 0, %s37
      %s41 = sphi 0, %s40
      %s57 = sphi 0, %s41
      %s61 = sphi 0, %s61
      %s63 = sphi 0, %s61
      %s64 = sphi 0, %s63
      %s78 = sphi 0, %s64
      %s86 = sphi 0, %s88
      %s89 = sphi 0, %s86
      %s90 = sphi 0, %s89
      %s106 = sphi 0, %s90
      %s112 = sphi 0, %s114
      %s115 = sphi 0, %s112
      %s116 = sphi 0, %s115
      %s132 = sphi 0, %s116
    $region4: #{spasrnn_forward.1} parent=1 // loop_header_branch
      %16 = sbr.rel (%p14) target = $region8
    $region5: #{spasrnn_forward.1} parent=1 // loop_body
      %s18 = ssub.s32 %s13, 1
      %s19 = ssub.s32 %s13, 2
      %s26 = sadd.s32 1, %s21
      %p27 = scmp.ge.s32.totalorder %s26, 4
      %s28 = scalar_select %p27, 0, %s26
      %s29 = sadd.s32 1, %s20
      %s30 = scalar_select %p27, %s29, %s20
      %p31 = scmp.ge.s32.totalorder %s30, 2
      %s32 = scalar_select %p31, 0, %s30
      %s33 = ssub.s32 %s21, %s28
      %s34 = ssub.s32 %s20, %s32
      %s35 = sor.u32 %s33, %s34
      %p36 = scmp.eq.s32.totalorder %s35, 0
      %s38 = sadd.s32 %s37, 1
      %s39 = scalar_select %p36, %s37, %s38
      %p42 = pneg %p36
      %p43 = scmp.eq.s32.totalorder %s13, 7
      %p44 = por %p42, %p43
      %p45 = scmp.ne.s32.totalorder %s37, %s40
      %p46 = scmp.eq.s32.totalorder %s13, 0
      %p47 = por %p45, %p46
      %p48 = scmp.ne.s32.totalorder %s37, %s40
      %p49 = scmp.eq.s32.totalorder %s18, 7
      %p50 = por %p48, %p49
      %p51 = scmp.ne.s32.totalorder %s40, %s41
      %p52 = scmp.eq.s32.totalorder %s18, 0
      %p53 = por %p51, %p52
      %p54 = scmp.ne.s32.totalorder %s40, %s41
      %p55 = scmp.eq.s32.totalorder %s19, 7
      %p56 = por %p54, %p55
      %p58 = scmp.ne.s32.totalorder %s41, %s57
      %p59 = scmp.eq.s32.totalorder %s19, 0
      %p60 = por %p58, %p59
      %s62 = sadd.s32 %s61, 1
      %p65 = scmp.eq.s32.totalorder %s13, 7
      %p66 = scmp.ne.s32.totalorder %s61, %s63
      %p67 = scmp.eq.s32.totalorder %s13, 0
      %p68 = por %p66, %p67
      %p69 = scmp.ne.s32.totalorder %s61, %s63
      %p70 = scmp.eq.s32.totalorder %s18, 7
      %p71 = por %p69, %p70
      %p72 = scmp.ne.s32.totalorder %s63, %s64
      %p73 = scmp.eq.s32.totalorder %s18, 0
      %p74 = por %p72, %p73
      %p75 = scmp.ne.s32.totalorder %s63, %s64
      %p76 = scmp.eq.s32.totalorder %s19, 7
      %p77 = por %p75, %p76
      %p79 = scmp.ne.s32.totalorder %s64, %s78
      %p80 = scmp.eq.s32.totalorder %s19, 0
      %p81 = por %p79, %p80
      %s82 = ssub.s32 %s21, %s28
      %s83 = ssub.s32 %s20, %s32
      %s84 = sor.u32 %s82, %s83
      %p85 = scmp.eq.s32.totalorder %s84, 0
      %s87 = sadd.s32 %s86, 1
      %s88 = scalar_select %p85, %s86, %s87
      %p91 = pneg %p85
      %p92 = scmp.eq.s32.totalorder %s13, 7
      %p93 = por %p91, %p92
      %p94 = scmp.ne.s32.totalorder %s86, %s89
      %p95 = scmp.eq.s32.totalorder %s13, 0
      %p96 = por %p94, %p95
      %p97 = scmp.ne.s32.totalorder %s86, %s89
      %p98 = scmp.eq.s32.totalorder %s18, 7
      %p99 = por %p97, %p98
      %p100 = scmp.ne.s32.totalorder %s89, %s90
      %p101 = scmp.eq.s32.totalorder %s18, 0
      %p102 = por %p100, %p101
      %p103 = scmp.ne.s32.totalorder %s89, %s90
      %p104 = scmp.eq.s32.totalorder %s19, 7
      %p105 = por %p103, %p104
      %p107 = scmp.ne.s32.totalorder %s90, %s106
      %p108 = scmp.eq.s32.totalorder %s19, 0
      %p109 = por %p107, %p108
      %s110 = ssub.s32 %s20, %s32
      %p111 = scmp.eq.s32.totalorder %s110, 0
      %s113 = sadd.s32 %s112, 1
      %s114 = scalar_select %p111, %s112, %s113
      %p117 = pneg %p111
      %p118 = scmp.eq.s32.totalorder %s13, 7
      %p119 = por %p117, %p118
      %p120 = scmp.ne.s32.totalorder %s112, %s115
      %p121 = scmp.eq.s32.totalorder %s13, 0
      %p122 = por %p120, %p121
      %p123 = scmp.ne.s32.totalorder %s112, %s115
      %p124 = scmp.eq.s32.totalorder %s18, 7
      %p125 = por %p123, %p124
      %p126 = scmp.ne.s32.totalorder %s115, %s116
      %p127 = scmp.eq.s32.totalorder %s18, 0
      %p128 = por %p126, %p127
      %p129 = scmp.ne.s32.totalorder %s115, %s116
      %p130 = scmp.eq.s32.totalorder %s19, 7
      %p131 = por %p129, %p130
      %p133 = scmp.ne.s32.totalorder %s116, %s132
      %p134 = scmp.eq.s32.totalorder %s19, 0
      %p135 = por %p133, %p134
      %p136 = scmp.le.s32.totalorder 1, %s13
      %p137 = scmp.lt.s32.totalorder %s13, 9
      %p138 = pnand %p136, %p137
      %p139 = pneg %p138
      // Predicated region
      $region9: #{spasrnn_forward.1} parent=5 // pred_check
        _
      $region10: #{spasrnn_forward.1} parent=5 // pred_check_branch
        %141 = sbr.rel (%p138) target = $region12
      $region11: #{spasrnn_forward.1} parent=5 // pred_region
        %s142 = ssub.s32 %s13, 1
        // Predicated region
        $region13: #{spasrnn_forward.1} parent=11 // pred_check
          %p143 = pneg %p74
        $region14: #{spasrnn_forward.1} parent=11 // pred_check_branch
          %145 = sbr.rel (%p143) target = $region16
        $region15: #{spasrnn_forward.1} parent=11 // pred_region
          _
        $region16: #{spasrnn_forward.1} parent=11 // pred_fallthru
          _
      $region12: #{spasrnn_forward.1} parent=5 // pred_fallthru
        _
      %p146 = scmp.lt.s32.totalorder %s13, 8
      // Predicated region
      $region17: #{spasrnn_forward.1} parent=5 // pred_check
        %p147 = pneg %p146
      $region18: #{spasrnn_forward.1} parent=5 // pred_check_branch
        %149 = sbr.rel (%p147) target = $region20
      $region19: #{spasrnn_forward.1} parent=5 // pred_region
        // Predicated region
        $region21: #{spasrnn_forward.1} parent=19 // pred_check
          %p150 = pneg %p47
        $region22: #{spasrnn_forward.1} parent=19 // pred_check_branch
          %152 = sbr.rel (%p150) target = $region24
        $region23: #{spasrnn_forward.1} parent=19 // pred_region
          %s153 = sand.u32 %s37, 1
          %s154 = sand.u32 %s37, 1
          %s155 = smul.addr %s154, 64
          %s156 = scalar_lea.vmem [#allocation5], %s155
          %s157 = smul.u32 8, %s21
          %s158 = smul.u32 2, %s20
          %s159 = smul.addr %s157, 4
          %s160 = sadd.s32 %s158, %s159
          %s161 = smul.addr %s160, 4
          %s162 = scalar_lea.vmem %s0, %s161
          // Predicated region
          $region25: #{spasrnn_forward.1} parent=23 // pred_check
            _
          $region26: #{spasrnn_forward.1} parent=23 // pred_check_branch
            %164 = sbr.rel (0) target = $region28
          $region27: #{spasrnn_forward.1} parent=23 // pred_region
            // Predicated region
            $region29: #{spasrnn_forward.1} parent=27 // pred_check
              _
            $region30: #{spasrnn_forward.1} parent=27 // pred_check_branch
              %166 = sbr.rel target = $region32
            $region31: #{spasrnn_forward.1} parent=27 // pred_region
              // Predicated region
              $region44: #{spasrnn_forward.1} parent=31 // pred_check
                _
              $region45: #{spasrnn_forward.1} parent=31 // pred_check_branch
                %211 = sbr.rel (0) target = $region47
              $region46: #{spasrnn_forward.1} parent=31 // pred_region
                loop: start=0, step=1, limit=1
                $region48: #{spasrnn_forward.1} parent=46 // loop_pre_header
                  _
                $region49: #{spasrnn_forward.1} parent=46 // loop_header
                  %s213 = sphi 0, %s217
                  %p214 = scmp.ge.s32.totalorder %s213, 1
                  %s218 = sphi %s162, %s162
                  %s219 = sphi %s156, %s156
                $region50: #{spasrnn_forward.1} parent=46 // loop_header_branch
                  %216 = sbr.rel (%p214) target = $region54
                $region51: #{spasrnn_forward.1} parent=46 // loop_body
                  _
                $region52: #{spasrnn_forward.1} parent=46 // loop_footer
                  %s217 = sadd.s32 1, %s213
                $region53: #{spasrnn_forward.1} parent=46 // loop_footer_branch
                  %212 = sbr.rel target = $region49
                $region54: #{spasrnn_forward.1} parent=46 // loop_exit
                  _
                loop: start=0, step=1, limit=1
                $region55: #{spasrnn_forward.1} parent=46 // loop_pre_header
                  _
                $region56: #{spasrnn_forward.1} parent=46 // loop_header
                  %s222 = sphi 0, %s226
                  %p223 = scmp.ge.s32.totalorder %s222, 1
                  %s227 = sphi %s162, %s162
                  %s228 = sphi %s156, %s156
                $region57: #{spasrnn_forward.1} parent=46 // loop_header_branch
                  %225 = sbr.rel (%p223) target = $region61
                $region58: #{spasrnn_forward.1} parent=46 // loop_body
                  %v229 = vld [vmem:[%s227] sm:$0xf]
                  %230 = vst [vmem:[%s228] sm:$0xf] %v229
                  %v231 = vld [vmem:[%s227 + $0x4] sm:$0xf]
                  %232 = vst [vmem:[%s228 + $0x4] sm:$0xf] %v231
                  %v233 = vld [vmem:[%s227 + $0x10] sm:$0xf]
                  %234 = vst [vmem:[%s228 + $0x8] sm:$0xf] %v233
                  %v235 = vld [vmem:[%s227 + $0x14] sm:$0xf]
                  %236 = vst [vmem:[%s228 + $0xc] sm:$0xf] %v235
                  %v237 = vld [vmem:[%s227 + $0x20] sm:$0xf]
                  %238 = vst [vmem:[%s228 + $0x10] sm:$0xf] %v237
                  %v239 = vld [vmem:[%s227 + $0x24] sm:$0xf]
                  %240 = vst [vmem:[%s228 + $0x14] sm:$0xf] %v239
                  %v241 = vld [vmem:[%s227 + $0x30] sm:$0xf]
                  %242 = vst [vmem:[%s228 + $0x18] sm:$0xf] %v241
                  %v243 = vld [vmem:[%s227 + $0x34] sm:$0xf]
                  %244 = vst [vmem:[%s228 + $0x1c] sm:$0xf] %v243
                  %v245 = vld [vmem:[%s227 + $0x40] sm:$0xf]
                  %246 = vst [vmem:[%s228 + $0x20] sm:$0xf] %v245
                  %v247 = vld [vmem:[%s227 + $0x44] sm:$0xf]
                  %248 = vst [vmem:[%s228 + $0x24] sm:$0xf] %v247
                  %v249 = vld [vmem:[%s227 + $0x50] sm:$0xf]
                  %250 = vst [vmem:[%s228 + $0x28] sm:$0xf] %v249
                  %v251 = vld [vmem:[%s227 + $0x54] sm:$0xf]
                  %252 = vst [vmem:[%s228 + $0x2c] sm:$0xf] %v251
                  %v253 = vld [vmem:[%s227 + $0x60] sm:$0xf]
                  %254 = vst [vmem:[%s228 + $0x30] sm:$0xf] %v253
                  %v255 = vld [vmem:[%s227 + $0x64] sm:$0xf]
                  %256 = vst [vmem:[%s228 + $0x34] sm:$0xf] %v255
                  %v257 = vld [vmem:[%s227 + $0x70] sm:$0xf]
                  %258 = vst [vmem:[%s228 + $0x38] sm:$0xf] %v257
                  %v259 = vld [vmem:[%s227 + $0x74] sm:$0xf]
                  %260 = vst [vmem:[%s228 + $0x3c] sm:$0xf] %v259
                $region59: #{spasrnn_forward.1} parent=46 // loop_footer
                  %s226 = sadd.s32 1, %s222
                $region60: #{spasrnn_forward.1} parent=46 // loop_footer_branch
                  %221 = sbr.rel target = $region56
                $region61: #{spasrnn_forward.1} parent=46 // loop_exit
                  _
              $region47: #{spasrnn_forward.1} parent=31 // pred_fallthru
                _
            $region32: #{spasrnn_forward.1} parent=27 // pred_fallthru
              _
            // Predicated region
            $region33: #{spasrnn_forward.1} parent=27 // pred_check
              _
            $region34: #{spasrnn_forward.1} parent=27 // pred_check_branch
              %168 = sbr.rel (0) target = $region36
            $region35: #{spasrnn_forward.1} parent=27 // pred_region
              loop: start=0, step=1, limit=1
              $region37: #{spasrnn_forward.1} parent=35 // loop_pre_header
                _
              $region38: #{spasrnn_forward.1} parent=35 // loop_header
                %s171 = sphi 0, %s175
                %p172 = scmp.ge.s32.totalorder %s171, 1
                %s176 = sphi %s162, %s162
                %s177 = sphi %s156, %s156
              $region39: #{spasrnn_forward.1} parent=35 // loop_header_branch
                %174 = sbr.rel (%p172) target = $region43
              $region40: #{spasrnn_forward.1} parent=35 // loop_body
                %v178 = vld [vmem:[%s176] sm:$0xf]
                %179 = vst [vmem:[%s177] sm:$0xf] %v178
                %v180 = vld [vmem:[%s176 + $0x4] sm:$0xf]
                %181 = vst [vmem:[%s177 + $0x4] sm:$0xf] %v180
                %v182 = vld [vmem:[%s176 + $0x10] sm:$0xf]
                %183 = vst [vmem:[%s177 + $0x8] sm:$0xf] %v182
                %v184 = vld [vmem:[%s176 + $0x14] sm:$0xf]
                %185 = vst [vmem:[%s177 + $0xc] sm:$0xf] %v184
                %v186 = vld [vmem:[%s176 + $0x20] sm:$0xf]
                %187 = vst [vmem:[%s177 + $0x10] sm:$0xf] %v186
                %v188 = vld [vmem:[%s176 + $0x24] sm:$0xf]
                %189 = vst [vmem:[%s177 + $0x14] sm:$0xf] %v188
                %v190 = vld [vmem:[%s176 + $0x30] sm:$0xf]
                %191 = vst [vmem:[%s177 + $0x18] sm:$0xf] %v190
                %v192 = vld [vmem:[%s176 + $0x34] sm:$0xf]
                %193 = vst [vmem:[%s177 + $0x1c] sm:$0xf] %v192
                %v194 = vld [vmem:[%s176 + $0x40] sm:$0xf]
                %195 = vst [vmem:[%s177 + $0x20] sm:$0xf] %v194
                %v196 = vld [vmem:[%s176 + $0x44] sm:$0xf]
                %197 = vst [vmem:[%s177 + $0x24] sm:$0xf] %v196
                %v198 = vld [vmem:[%s176 + $0x50] sm:$0xf]
                %199 = vst [vmem:[%s177 + $0x28] sm:$0xf] %v198
                %v200 = vld [vmem:[%s176 + $0x54] sm:$0xf]
                %201 = vst [vmem:[%s177 + $0x2c] sm:$0xf] %v200
                %v202 = vld [vmem:[%s176 + $0x60] sm:$0xf]
                %203 = vst [vmem:[%s177 + $0x30] sm:$0xf] %v202
                %v204 = vld [vmem:[%s176 + $0x64] sm:$0xf]
                %205 = vst [vmem:[%s177 + $0x34] sm:$0xf] %v204
                %v206 = vld [vmem:[%s176 + $0x70] sm:$0xf]
                %207 = vst [vmem:[%s177 + $0x38] sm:$0xf] %v206
                %v208 = vld [vmem:[%s176 + $0x74] sm:$0xf]
                %209 = vst [vmem:[%s177 + $0x3c] sm:$0xf] %v208
              $region41: #{spasrnn_forward.1} parent=35 // loop_footer
                %s175 = sadd.s32 1, %s171
              $region42: #{spasrnn_forward.1} parent=35 // loop_footer_branch
                %170 = sbr.rel target = $region38
              $region43: #{spasrnn_forward.1} parent=35 // loop_exit
                _
            $region36: #{spasrnn_forward.1} parent=27 // pred_fallthru
              _
          $region28: #{spasrnn_forward.1} parent=23 // pred_fallthru
            _
          %261 = vnop
        $region24: #{spasrnn_forward.1} parent=19 // pred_fallthru
          _
      $region20: #{spasrnn_forward.1} parent=5 // pred_fallthru
        _
      %p262 = scmp.le.s32.totalorder 1, %s13
      %p263 = scmp.lt.s32.totalorder %s13, 9
      %p264 = pnand %p262, %p263
      %p265 = pneg %p264
      // Predicated region
      $region62: #{spasrnn_forward.1} parent=5 // pred_check
        _
      $region63: #{spasrnn_forward.1} parent=5 // pred_check_branch
        %267 = sbr.rel (%p264) target = $region65
      $region64: #{spasrnn_forward.1} parent=5 // pred_region
        %s268 = ssub.s32 %s13, 1
        %s269 = sand.u32 %s40, 1
        %s270 = sand.u32 %s40, 1
        %s271 = smul.addr %s270, 64
        %s272 = scalar_lea.vmem [#allocation5], %s271
        // Predicated region
        $region66: #{spasrnn_forward.1} parent=64 // pred_check
          %p273 = pneg %p53
        $region67: #{spasrnn_forward.1} parent=64 // pred_check_branch
          %275 = sbr.rel (%p273) target = $region69
        $region68: #{spasrnn_forward.1} parent=64 // pred_region
          _
        $region69: #{spasrnn_forward.1} parent=64 // pred_fallthru
          _
        %s276 = sand.u32 %s40, 1
        %s277 = sand.u32 %s40, 1
        %s278 = smul.addr %s277, 64
        %s279 = scalar_lea.vmem [#allocation5], %s278
        %p280 = pneg %p53
        %p281 = pneg %p50
        %p282 = pneg %p74
        %p283 = pneg %p71
        %p284 = pneg %p102
        %p285 = pneg %p99
        %s286 = sand.u32 %s89, 1
        %s287 = scalar_lea.sflag [#allocation7], %s286
        %s288 = sand.u32 %s89, 1
        %s289 = smul.addr %s288, 64
        %s290 = scalar_lea.vmem [#allocation6], %s289
        %p291 = pneg %p128
        %p292 = pneg %p125
        %s293 = smul.u32 2, %s22
        %p294 = scmp.lt.s32.totalorder %s293, 3
        %s295 = scalar_select %p294, %s293, 3
        %s296 = smul.addr %s295, 8
        %s297 = scalar_lea.vmem %s3, %s296
        %s298 = smul.u32 8, %s23
        %s299 = smul.u32 2, %s22
        %s300 = smul.u32 8, %s23
        %s301 = smul.u32 2, %s22
        %s302 = smul.u32 2, %s22
        %p303 = scmp.lt.s32.totalorder %s302, 3
        %s304 = scalar_select %p303, %s302, 3
        %s305 = smul.addr %s304, 8
        %s306 = scalar_lea.vmem %s3, %s305
        %s307 = smul.u32 2, %s22
        %p310 = scmp.eq.s32.totalorder %s23, 0
        // Predicated region
        $region70: #{spasrnn_forward.1} parent=64 // pred_check
          %p311 = pneg %p310
        $region71: #{spasrnn_forward.1} parent=64 // pred_check_branch
          %313 = sbr.rel (%p311) target = $region73
        $region72: #{spasrnn_forward.1} parent=64 // pred_region
          %314 = vst [vmem:[#allocation2] sm:$0xff] 0.0
          %315 = vst [vmem:[#allocation2 + $0x8] sm:$0xff] 0.0
          %316 = vst [vmem:[#allocation3] sm:$0xff] 0
          %317 = vst [vmem:[#allocation4] sm:$0xff] 0.0
          %318 = vst [vmem:[#allocation4 + $0x8] sm:$0xff] 0.0
          %319 = vst [vmem:[%s306] sm:$0xff] 0.0
          %320 = vst [vmem:[%s306 + $0x8] sm:$0xff] 0.0
        $region73: #{spasrnn_forward.1} parent=64 // pred_fallthru
          _
        %v321 = vld [vmem:[%s1] sm:$0xf]
        %v322 = vld [vmem:[%s1 + $0x4] sm:$0xf]
        %v323 = vld [vmem:[%s1 + $0x8] sm:$0xf]
        %v324 = vld [vmem:[%s1 + $0xc] sm:$0xf]
        %v325 = vld [vmem:[%s1 + $0x10] sm:$0xf]
        %v326 = vld [vmem:[%s1 + $0x14] sm:$0xf]
        %v327 = vld [vmem:[%s1 + $0x18] sm:$0xf]
        %v328 = vld [vmem:[%s1 + $0x1c] sm:$0xf]
        %v329 = vld [vmem:[%s1 + $0x20] sm:$0xf]
        %v330 = vld [vmem:[%s1 + $0x24] sm:$0xf]
        %v331 = vld [vmem:[%s1 + $0x28] sm:$0xf]
        %v332 = vld [vmem:[%s1 + $0x2c] sm:$0xf]
        %v333 = vld [vmem:[%s1 + $0x30] sm:$0xf]
        %v334 = vld [vmem:[%s1 + $0x34] sm:$0xf]
        %v335 = vld [vmem:[%s1 + $0x38] sm:$0xf]
        %v336 = vld [vmem:[%s1 + $0x3c] sm:$0xf]
        %v337 = vld [vmem:[#allocation2] sm:$0xff]
        %v338 = vld [vmem:[#allocation2 + $0x8] sm:$0xff]
        %v339 = vld [vmem:[#allocation3] sm:$0xff]
        %v340 = vld [vmem:[%s272] sm:$0xf]
        %v341 = vld [vmem:[%s272 + $0x4] sm:$0xf]
        %v342 = vunpack.c.l.bf16 %v340
        %v343 = vunpack.c.l.bf16 %v341
        %v360 = vunpack.c.l.b16 %v321
        %v361 = vunpack.c.l.b16 %v322
        %v362 = vunpack.c.l.b16 %v323
        %v363 = vunpack.c.l.b16 %v324
        %v364 = vunpack.c.l.b16 %v325
        %v365 = vunpack.c.l.b16 %v326
        %v366 = vunpack.c.l.b16 %v327
        %v367 = vunpack.c.l.b16 %v328
        %v368 = vunpack.c.l.b16 %v329
        %v369 = vunpack.c.l.b16 %v330
        %v370 = vunpack.c.l.b16 %v331
        %v371 = vunpack.c.l.b16 %v332
        %v372 = vunpack.c.l.b16 %v333
        %v373 = vunpack.c.l.b16 %v334
        %v374 = vunpack.c.l.b16 %v335
        %v375 = vunpack.c.l.b16 %v336
        %v376 = vpack.c.b16 %v361, %v360
        %v377 = vpack.c.b16 %v363, %v362
        %v378 = vpack.c.b16 %v365, %v364
        %v379 = vpack.c.b16 %v367, %v366
        %v380 = vpack.c.b16 %v369, %v368
        %v381 = vpack.c.b16 %v371, %v370
        %v382 = vpack.c.b16 %v373, %v372
        %v383 = vpack.c.b16 %v375, %v374
        %392 = vmatprep.subr.bf16.mxu0 0
        %393 = vmatpush1.bf16.msra.mxu0 %v376
        %394 = vmatprep.subr.bf16.mxu0 0
        %395 = vmatpush1.bf16.msra.mxu0 %v377
        %396 = vmatprep.subr.bf16.mxu0 0
        %397 = vmatpush1.bf16.msra.mxu0 %v378
        %398 = vmatprep.subr.bf16.mxu0 0
        %399 = vmatpush1.bf16.msra.mxu0 %v379
        %400 = vmatprep.subr.bf16.mxu0 0
        %401 = vmatpush1.bf16.msra.mxu0 %v380
        %402 = vmatprep.subr.bf16.mxu0 0
        %403 = vmatpush1.bf16.msra.mxu0 %v381
        %404 = vmatprep.subr.bf16.mxu0 0
        %405 = vmatpush1.bf16.msra.mxu0 %v382
        %406 = vmatprep.subr.bf16.mxu0 0
        %407 = vmatpush1.bf16.msra.mxu0 %v383
        %408 = vmatprep.subr.bf16.mxu0 0
        %409 = vmatpush1.bf16.msra.mxu0 0
        %410 = vmatprep.subr.bf16.mxu0 0
        %411 = vmatpush1.bf16.msra.mxu0 0
        %412 = vmatprep.subr.bf16.mxu0 0
        %413 = vmatpush1.bf16.msra.mxu0 0
        %414 = vmatprep.subr.bf16.mxu0 0
        %415 = vmatpush1.bf16.msra.mxu0 0
        %416 = vmatprep.subr.bf16.mxu0 0
        %417 = vmatpush1.bf16.msra.mxu0 0
        %418 = vmatprep.subr.bf16.mxu0 0
        %419 = vmatpush1.bf16.msra.mxu0 0
        %420 = vmatprep.subr.bf16.mxu0 0
        %421 = vmatpush1.bf16.msra.mxu0 0
        %422 = vmatprep.subr.bf16.mxu0 0
        %423 = vmatpush1.bf16.msra.mxu0 0
        %424 = vmatprep.mubr.bf16.mxu0 0
        %425 = vmatmul.mubr.bf16.gmra.mrb[0].mxu0 %v339
        %v426 = vpop.f32.mrb[0].mxu0
        %v427 = vadd.f32 0.0, %v426
        %v428 = vpop.f32.mrb[0].mxu0
        %v429 = vpop.f32.mrb[0].mxu0
        %v430 = vadd.f32 0.0, %v429
        %v431 = vpop.f32.mrb[0].mxu0
        %432 = vdwg.mxu0
        %v433 = vadd.f32 %v342, %v427
        %v434 = vadd.f32 %v343, %v430
        %v435 = vmul.f32 %v337, 0.5
        %v436 = vmul.f32 %v338, 0.5
        %v437 = vsub.bf16 1065369472, %v339
        %v438 = vunpack.c.l.bf16 %v437
        %v439 = vunpack.c.h.bf16 %v437
        %v440 = vmul.f32 %v435, %v438
        %v441 = vmul.f32 %v436, %v439
        %v442 = vadd.f32 %v440, %v433
        %v443 = vadd.f32 %v441, %v434
        %vm444 = vcmp.ge.f32.partialorder %v442, 0.5
        %vm445 = vcmp.ge.f32.partialorder %v443, 0.5
        %v446 = vsel %vm444, 1, 0
        %v447 = vsel %vm445, 1, 0
        %v448 = vcvt.s32.f32 %v446
        %v449 = vcvt.s32.f32 %v447
        %v450 = vpack.c.bf16 %v449, %v448
        %v452 = vunpack.c.l.b16 %v450
        %v453 = vunpack.c.h.b16 %v450
        %v454 = vpack.c.b16 %v452, %v452
        %v455 = vpack.c.b16 %v453, %v453
        %458 = vst [vmem:[%s290] sm:$0xf] %v454
        %459 = vst [vmem:[%s290 + $0x4] sm:$0xf] %v455
        %v460 = vld [vmem:[#allocation4] sm:$0xff]
        %v461 = vld [vmem:[#allocation4 + $0x8] sm:$0xff]
        %v462 = vmul.f32 %v460, 0.8
        %v463 = vmul.f32 %v461, 0.8
        %v464 = vunpack.c.l.bf16 %v450
        %v465 = vunpack.c.h.bf16 %v450
        %v466 = vadd.f32 %v462, %v464
        %v467 = vadd.f32 %v463, %v465
        %468 = vst [vmem:[#allocation4] sm:$0xff] %v466
        %469 = vst [vmem:[#allocation4 + $0x8] sm:$0xff] %v467
        %v470 = vld [vmem:[%s306] sm:$0xff]
        %v471 = vld [vmem:[%s306 + $0x8] sm:$0xff]
        %v472 = vadd.f32 %v470, %v466
        %v473 = vadd.f32 %v471, %v467
        %474 = vst [vmem:[%s306] sm:$0xff] %v472
        %475 = vst [vmem:[%s306 + $0x8] sm:$0xff] %v473
        %s476 = scalar_lea.vmem %s272, 8 [#allocation5]
        %v477 = vld [vmem:[%s476] sm:$0xf]
        %v478 = vld [vmem:[%s476 + $0x4] sm:$0xf]
        %v479 = vunpack.c.l.bf16 %v477
        %v480 = vunpack.c.l.bf16 %v478
        %481 = vmatprep.subr.bf16.mxu0 0
        %482 = vmatpush1.bf16.msra.mxu0 %v376
        %483 = vmatprep.subr.bf16.mxu0 0
        %484 = vmatpush1.bf16.msra.mxu0 %v377
        %485 = vmatprep.subr.bf16.mxu0 0
        %486 = vmatpush1.bf16.msra.mxu0 %v378
        %487 = vmatprep.subr.bf16.mxu0 0
        %488 = vmatpush1.bf16.msra.mxu0 %v379
        %489 = vmatprep.subr.bf16.mxu0 0
        %490 = vmatpush1.bf16.msra.mxu0 %v380
        %491 = vmatprep.subr.bf16.mxu0 0
        %492 = vmatpush1.bf16.msra.mxu0 %v381
        %493 = vmatprep.subr.bf16.mxu0 0
        %494 = vmatpush1.bf16.msra.mxu0 %v382
        %495 = vmatprep.subr.bf16.mxu0 0
        %496 = vmatpush1.bf16.msra.mxu0 %v383
        %497 = vmatprep.subr.bf16.mxu0 0
        %498 = vmatpush1.bf16.msra.mxu0 0
        %499 = vmatprep.subr.bf16.mxu0 0
        %500 = vmatpush1.bf16.msra.mxu0 0
        %501 = vmatprep.subr.bf16.mxu0 0
        %502 = vmatpush1.bf16.msra.mxu0 0
        %503 = vmatprep.subr.bf16.mxu0 0
        %504 = vmatpush1.bf16.msra.mxu0 0
        %505 = vmatprep.subr.bf16.mxu0 0
        %506 = vmatpush1.bf16.msra.mxu0 0
        %507 = vmatprep.subr.bf16.mxu0 0
        %508 = vmatpush1.bf16.msra.mxu0 0
        %509 = vmatprep.subr.bf16.mxu0 0
        %510 = vmatpush1.bf16.msra.mxu0 0
        %511 = vmatprep.subr.bf16.mxu0 0
        %512 = vmatpush1.bf16.msra.mxu0 0
        %513 = vmatprep.mubr.bf16.mxu0 0
        %514 = vmatmul.mubr.bf16.gmra.mrb[0].mxu0 %v450
        %v515 = vpop.f32.mrb[0].mxu0
        %v516 = vadd.f32 0.0, %v515
        %v517 = vpop.f32.mrb[0].mxu0
        %v518 = vpop.f32.mrb[0].mxu0
        %v519 = vadd.f32 0.0, %v518
        %v520 = vpop.f32.mrb[0].mxu0
        %521 = vdwg.mxu0
        %v522 = vadd.f32 %v479, %v516
        %v523 = vadd.f32 %v480, %v519
        %v524 = vmul.f32 %v442, 0.5
        %v525 = vmul.f32 %v443, 0.5
        %v526 = vsub.bf16 1065369472, %v450
        %v527 = vunpack.c.l.bf16 %v526
        %v528 = vunpack.c.h.bf16 %v526
        %v529 = vmul.f32 %v524, %v527
        %v530 = vmul.f32 %v525, %v528
        %v531 = vadd.f32 %v529, %v522
        %v532 = vadd.f32 %v530, %v523
        %vm533 = vcmp.ge.f32.partialorder %v531, 0.5
        %vm534 = vcmp.ge.f32.partialorder %v532, 0.5
        %v535 = vsel %vm533, 1, 0
        %v536 = vsel %vm534, 1, 0
        %v537 = vcvt.s32.f32 %v535
        %v538 = vcvt.s32.f32 %v536
        %v539 = vpack.c.bf16 %v538, %v537
        %v541 = vunpack.c.l.b16 %v539
        %v542 = vunpack.c.h.b16 %v539
        %v543 = vpack.c.b16 %v541, %v541
        %v544 = vpack.c.b16 %v542, %v542
        %s547 = scalar_lea.vmem %s290, 8 [#allocation6]
        %548 = vst [vmem:[%s547] sm:$0xf] %v543
        %549 = vst [vmem:[%s547 + $0x4] sm:$0xf] %v544
        %v550 = vld [vmem:[#allocation4] sm:$0xff]
        %v551 = vld [vmem:[#allocation4 + $0x8] sm:$0xff]
        %v552 = vmul.f32 %v550, 0.8
        %v553 = vmul.f32 %v551, 0.8
        %v554 = vunpack.c.l.bf16 %v539
        %v555 = vunpack.c.h.bf16 %v539
        %v556 = vadd.f32 %v552, %v554
        %v557 = vadd.f32 %v553, %v555
        %558 = vst [vmem:[#allocation4] sm:$0xff] %v556
        %559 = vst [vmem:[#allocation4 + $0x8] sm:$0xff] %v557
        %v560 = vld [vmem:[%s306] sm:$0xff]
        %v561 = vld [vmem:[%s306 + $0x8] sm:$0xff]
        %v562 = vadd.f32 %v560, %v556
        %v563 = vadd.f32 %v561, %v557
        %564 = vst [vmem:[%s306] sm:$0xff] %v562
        %565 = vst [vmem:[%s306 + $0x8] sm:$0xff] %v563
        %s566 = scalar_lea.vmem %s272, 16 [#allocation5]
        %v567 = vld [vmem:[%s566] sm:$0xf]
        %v568 = vld [vmem:[%s566 + $0x4] sm:$0xf]
        %v569 = vunpack.c.l.bf16 %v567
        %v570 = vunpack.c.l.bf16 %v568
        %571 = vmatprep.subr.bf16.mxu0 0
        %572 = vmatpush1.bf16.msra.mxu0 %v376
        %573 = vmatprep.subr.bf16.mxu0 0
        %574 = vmatpush1.bf16.msra.mxu0 %v377
        %575 = vmatprep.subr.bf16.mxu0 0
        %576 = vmatpush1.bf16.msra.mxu0 %v378
        %577 = vmatprep.subr.bf16.mxu0 0
        %578 = vmatpush1.bf16.msra.mxu0 %v379
        %579 = vmatprep.subr.bf16.mxu0 0
        %580 = vmatpush1.bf16.msra.mxu0 %v380
        %581 = vmatprep.subr.bf16.mxu0 0
        %582 = vmatpush1.bf16.msra.mxu0 %v381
        %583 = vmatprep.subr.bf16.mxu0 0
        %584 = vmatpush1.bf16.msra.mxu0 %v382
        %585 = vmatprep.subr.bf16.mxu0 0
        %586 = vmatpush1.bf16.msra.mxu0 %v383
        %587 = vmatprep.subr.bf16.mxu0 0
        %588 = vmatpush1.bf16.msra.mxu0 0
        %589 = vmatprep.subr.bf16.mxu0 0
        %590 = vmatpush1.bf16.msra.mxu0 0
        %591 = vmatprep.subr.bf16.mxu0 0
        %592 = vmatpush1.bf16.msra.mxu0 0
        %593 = vmatprep.subr.bf16.mxu0 0
        %594 = vmatpush1.bf16.msra.mxu0 0
        %595 = vmatprep.subr.bf16.mxu0 0
        %596 = vmatpush1.bf16.msra.mxu0 0
        %597 = vmatprep.subr.bf16.mxu0 0
        %598 = vmatpush1.bf16.msra.mxu0 0
        %599 = vmatprep.subr.bf16.mxu0 0
        %600 = vmatpush1.bf16.msra.mxu0 0
        %601 = vmatprep.subr.bf16.mxu0 0
        %602 = vmatpush1.bf16.msra.mxu0 0
        %603 = vmatprep.mubr.bf16.mxu0 0
        %604 = vmatmul.mubr.bf16.gmra.mrb[0].mxu0 %v539
        %v605 = vpop.f32.mrb[0].mxu0
        %v606 = vadd.f32 0.0, %v605
        %v607 = vpop.f32.mrb[0].mxu0
        %v608 = vpop.f32.mrb[0].mxu0
        %v609 = vadd.f32 0.0, %v608
        %v610 = vpop.f32.mrb[0].mxu0
        %611 = vdwg.mxu0
        %v612 = vadd.f32 %v569, %v606
        %v613 = vadd.f32 %v570, %v609
        %v614 = vmul.f32 %v531, 0.5
        %v615 = vmul.f32 %v532, 0.5
        %v616 = vsub.bf16 1065369472, %v539
        %v617 = vunpack.c.l.bf16 %v616
        %v618 = vunpack.c.h.bf16 %v616
        %v619 = vmul.f32 %v614, %v617
        %v620 = vmul.f32 %v615, %v618
        %v621 = vadd.f32 %v619, %v612
        %v622 = vadd.f32 %v620, %v613
        %vm623 = vcmp.ge.f32.partialorder %v621, 0.5
        %vm624 = vcmp.ge.f32.partialorder %v622, 0.5
        %v625 = vsel %vm623, 1, 0
        %v626 = vsel %vm624, 1, 0
        %v627 = vcvt.s32.f32 %v625
        %v628 = vcvt.s32.f32 %v626
        %v629 = vpack.c.bf16 %v628, %v627
        %v631 = vunpack.c.l.b16 %v629
        %v632 = vunpack.c.h.b16 %v629
        %v633 = vpack.c.b16 %v631, %v631
        %v634 = vpack.c.b16 %v632, %v632
        %s637 = scalar_lea.vmem %s290, 16 [#allocation6]
        %638 = vst [vmem:[%s637] sm:$0xf] %v633
        %639 = vst [vmem:[%s637 + $0x4] sm:$0xf] %v634
        %v640 = vld [vmem:[#allocation4] sm:$0xff]
        %v641 = vld [vmem:[#allocation4 + $0x8] sm:$0xff]
        %v642 = vmul.f32 %v640, 0.8
        %v643 = vmul.f32 %v641, 0.8
        %v644 = vunpack.c.l.bf16 %v629
        %v645 = vunpack.c.h.bf16 %v629
        %v646 = vadd.f32 %v642, %v644
        %v647 = vadd.f32 %v643, %v645
        %648 = vst [vmem:[#allocation4] sm:$0xff] %v646
        %649 = vst [vmem:[#allocation4 + $0x8] sm:$0xff] %v647
        %v650 = vld [vmem:[%s306] sm:$0xff]
        %v651 = vld [vmem:[%s306 + $0x8] sm:$0xff]
        %v652 = vadd.f32 %v650, %v646
        %v653 = vadd.f32 %v651, %v647
        %654 = vst [vmem:[%s306] sm:$0xff] %v652
        %655 = vst [vmem:[%s306 + $0x8] sm:$0xff] %v653
        %s656 = scalar_lea.vmem %s272, 24 [#allocation5]
        %v657 = vld [vmem:[%s656] sm:$0xf]
        %v658 = vld [vmem:[%s656 + $0x4] sm:$0xf]
        %v659 = vunpack.c.l.bf16 %v657
        %v660 = vunpack.c.l.bf16 %v658
        %661 = vmatprep.subr.bf16.mxu0 0
        %662 = vmatpush1.bf16.msra.mxu0 %v376
        %663 = vmatprep.subr.bf16.mxu0 0
        %664 = vmatpush1.bf16.msra.mxu0 %v377
        %665 = vmatprep.subr.bf16.mxu0 0
        %666 = vmatpush1.bf16.msra.mxu0 %v378
        %667 = vmatprep.subr.bf16.mxu0 0
        %668 = vmatpush1.bf16.msra.mxu0 %v379
        %669 = vmatprep.subr.bf16.mxu0 0
        %670 = vmatpush1.bf16.msra.mxu0 %v380
        %671 = vmatprep.subr.bf16.mxu0 0
        %672 = vmatpush1.bf16.msra.mxu0 %v381
        %673 = vmatprep.subr.bf16.mxu0 0
        %674 = vmatpush1.bf16.msra.mxu0 %v382
        %675 = vmatprep.subr.bf16.mxu0 0
        %676 = vmatpush1.bf16.msra.mxu0 %v383
        %677 = vmatprep.subr.bf16.mxu0 0
        %678 = vmatpush1.bf16.msra.mxu0 0
        %679 = vmatprep.subr.bf16.mxu0 0
        %680 = vmatpush1.bf16.msra.mxu0 0
        %681 = vmatprep.subr.bf16.mxu0 0
        %682 = vmatpush1.bf16.msra.mxu0 0
        %683 = vmatprep.subr.bf16.mxu0 0
        %684 = vmatpush1.bf16.msra.mxu0 0
        %685 = vmatprep.subr.bf16.mxu0 0
        %686 = vmatpush1.bf16.msra.mxu0 0
        %687 = vmatprep.subr.bf16.mxu0 0
        %688 = vmatpush1.bf16.msra.mxu0 0
        %689 = vmatprep.subr.bf16.mxu0 0
        %690 = vmatpush1.bf16.msra.mxu0 0
        %691 = vmatprep.subr.bf16.mxu0 0
        %692 = vmatpush1.bf16.msra.mxu0 0
        %693 = vmatprep.mubr.bf16.mxu0 0
        %694 = vmatmul.mubr.bf16.gmra.mrb[0].mxu0 %v629
        %v695 = vpop.f32.mrb[0].mxu0
        %v696 = vadd.f32 0.0, %v695
        %v697 = vpop.f32.mrb[0].mxu0
        %v698 = vpop.f32.mrb[0].mxu0
        %v699 = vadd.f32 0.0, %v698
        %v700 = vpop.f32.mrb[0].mxu0
        %701 = vdwg.mxu0
        %v702 = vadd.f32 %v659, %v696
        %v703 = vadd.f32 %v660, %v699
        %v704 = vmul.f32 %v621, 0.5
        %v705 = vmul.f32 %v622, 0.5
        %v706 = vsub.bf16 1065369472, %v629
        %v707 = vunpack.c.l.bf16 %v706
        %v708 = vunpack.c.h.bf16 %v706
        %v709 = vmul.f32 %v704, %v707
        %v710 = vmul.f32 %v705, %v708
        %v711 = vadd.f32 %v709, %v702
        %v712 = vadd.f32 %v710, %v703
        %vm713 = vcmp.ge.f32.partialorder %v711, 0.5
        %vm714 = vcmp.ge.f32.partialorder %v712, 0.5
        %v715 = vsel %vm713, 1, 0
        %v716 = vsel %vm714, 1, 0
        %v717 = vcvt.s32.f32 %v715
        %v718 = vcvt.s32.f32 %v716
        %v719 = vpack.c.bf16 %v718, %v717
        %v721 = vunpack.c.l.b16 %v719
        %v722 = vunpack.c.h.b16 %v719
        %v723 = vpack.c.b16 %v721, %v721
        %v724 = vpack.c.b16 %v722, %v722
        %s727 = scalar_lea.vmem %s290, 24 [#allocation6]
        %728 = vst [vmem:[%s727] sm:$0xf] %v723
        %729 = vst [vmem:[%s727 + $0x4] sm:$0xf] %v724
        %v730 = vld [vmem:[#allocation4] sm:$0xff]
        %v731 = vld [vmem:[#allocation4 + $0x8] sm:$0xff]
        %v732 = vmul.f32 %v730, 0.8
        %v733 = vmul.f32 %v731, 0.8
        %v734 = vunpack.c.l.bf16 %v719
        %v735 = vunpack.c.h.bf16 %v719
        %v736 = vadd.f32 %v732, %v734
        %v737 = vadd.f32 %v733, %v735
        %738 = vst [vmem:[#allocation4] sm:$0xff] %v736
        %739 = vst [vmem:[#allocation4 + $0x8] sm:$0xff] %v737
        %v740 = vld [vmem:[%s306] sm:$0xff]
        %v741 = vld [vmem:[%s306 + $0x8] sm:$0xff]
        %v742 = vadd.f32 %v740, %v736
        %v743 = vadd.f32 %v741, %v737
        %744 = vst [vmem:[%s306] sm:$0xff] %v742
        %745 = vst [vmem:[%s306 + $0x8] sm:$0xff] %v743
        %s746 = scalar_lea.vmem %s272, 32 [#allocation5]
        %v747 = vld [vmem:[%s746] sm:$0xf]
        %v748 = vld [vmem:[%s746 + $0x4] sm:$0xf]
        %v749 = vunpack.c.l.bf16 %v747
        %v750 = vunpack.c.l.bf16 %v748
        %751 = vmatprep.subr.bf16.mxu0 0
        %752 = vmatpush1.bf16.msra.mxu0 %v376
        %753 = vmatprep.subr.bf16.mxu0 0
        %754 = vmatpush1.bf16.msra.mxu0 %v377
        %755 = vmatprep.subr.bf16.mxu0 0
        %756 = vmatpush1.bf16.msra.mxu0 %v378
        %757 = vmatprep.subr.bf16.mxu0 0
        %758 = vmatpush1.bf16.msra.mxu0 %v379
        %759 = vmatprep.subr.bf16.mxu0 0
        %760 = vmatpush1.bf16.msra.mxu0 %v380
        %761 = vmatprep.subr.bf16.mxu0 0
        %762 = vmatpush1.bf16.msra.mxu0 %v381
        %763 = vmatprep.subr.bf16.mxu0 0
        %764 = vmatpush1.bf16.msra.mxu0 %v382
        %765 = vmatprep.subr.bf16.mxu0 0
        %766 = vmatpush1.bf16.msra.mxu0 %v383
        %767 = vmatprep.subr.bf16.mxu0 0
        %768 = vmatpush1.bf16.msra.mxu0 0
        %769 = vmatprep.subr.bf16.mxu0 0
        %770 = vmatpush1.bf16.msra.mxu0 0
        %771 = vmatprep.subr.bf16.mxu0 0
        %772 = vmatpush1.bf16.msra.mxu0 0
        %773 = vmatprep.subr.bf16.mxu0 0
        %774 = vmatpush1.bf16.msra.mxu0 0
        %775 = vmatprep.subr.bf16.mxu0 0
        %776 = vmatpush1.bf16.msra.mxu0 0
        %777 = vmatprep.subr.bf16.mxu0 0
        %778 = vmatpush1.bf16.msra.mxu0 0
        %779 = vmatprep.subr.bf16.mxu0 0
        %780 = vmatpush1.bf16.msra.mxu0 0
        %781 = vmatprep.subr.bf16.mxu0 0
        %782 = vmatpush1.bf16.msra.mxu0 0
        %783 = vmatprep.mubr.bf16.mxu0 0
        %784 = vmatmul.mubr.bf16.gmra.mrb[0].mxu0 %v719
        %v785 = vpop.f32.mrb[0].mxu0
        %v786 = vadd.f32 0.0, %v785
        %v787 = vpop.f32.mrb[0].mxu0
        %v788 = vpop.f32.mrb[0].mxu0
        %v789 = vadd.f32 0.0, %v788
        %v790 = vpop.f32.mrb[0].mxu0
        %791 = vdwg.mxu0
        %v792 = vadd.f32 %v749, %v786
        %v793 = vadd.f32 %v750, %v789
        %v794 = vmul.f32 %v711, 0.5
        %v795 = vmul.f32 %v712, 0.5
        %v796 = vsub.bf16 1065369472, %v719
        %v797 = vunpack.c.l.bf16 %v796
        %v798 = vunpack.c.h.bf16 %v796
        %v799 = vmul.f32 %v794, %v797
        %v800 = vmul.f32 %v795, %v798
        %v801 = vadd.f32 %v799, %v792
        %v802 = vadd.f32 %v800, %v793
        %vm803 = vcmp.ge.f32.partialorder %v801, 0.5
        %vm804 = vcmp.ge.f32.partialorder %v802, 0.5
        %v805 = vsel %vm803, 1, 0
        %v806 = vsel %vm804, 1, 0
        %v807 = vcvt.s32.f32 %v805
        %v808 = vcvt.s32.f32 %v806
        %v809 = vpack.c.bf16 %v808, %v807
        %v811 = vunpack.c.l.b16 %v809
        %v812 = vunpack.c.h.b16 %v809
        %v813 = vpack.c.b16 %v811, %v811
        %v814 = vpack.c.b16 %v812, %v812
        %s817 = scalar_lea.vmem %s290, 32 [#allocation6]
        %818 = vst [vmem:[%s817] sm:$0xf] %v813
        %819 = vst [vmem:[%s817 + $0x4] sm:$0xf] %v814
        %v820 = vld [vmem:[#allocation4] sm:$0xff]
        %v821 = vld [vmem:[#allocation4 + $0x8] sm:$0xff]
        %v822 = vmul.f32 %v820, 0.8
        %v823 = vmul.f32 %v821, 0.8
        %v824 = vunpack.c.l.bf16 %v809
        %v825 = vunpack.c.h.bf16 %v809
        %v826 = vadd.f32 %v822, %v824
        %v827 = vadd.f32 %v823, %v825
        %828 = vst [vmem:[#allocation4] sm:$0xff] %v826
        %829 = vst [vmem:[#allocation4 + $0x8] sm:$0xff] %v827
        %v830 = vld [vmem:[%s306] sm:$0xff]
        %v831 = vld [vmem:[%s306 + $0x8] sm:$0xff]
        %v832 = vadd.f32 %v830, %v826
        %v833 = vadd.f32 %v831, %v827
        %834 = vst [vmem:[%s306] sm:$0xff] %v832
        %835 = vst [vmem:[%s306 + $0x8] sm:$0xff] %v833
        %s836 = scalar_lea.vmem %s272, 40 [#allocation5]
        %v837 = vld [vmem:[%s836] sm:$0xf]
        %v838 = vld [vmem:[%s836 + $0x4] sm:$0xf]
        %v839 = vunpack.c.l.bf16 %v837
        %v840 = vunpack.c.l.bf16 %v838
        %841 = vmatprep.subr.bf16.mxu0 0
        %842 = vmatpush1.bf16.msra.mxu0 %v376
        %843 = vmatprep.subr.bf16.mxu0 0
        %844 = vmatpush1.bf16.msra.mxu0 %v377
        %845 = vmatprep.subr.bf16.mxu0 0
        %846 = vmatpush1.bf16.msra.mxu0 %v378
        %847 = vmatprep.subr.bf16.mxu0 0
        %848 = vmatpush1.bf16.msra.mxu0 %v379
        %849 = vmatprep.subr.bf16.mxu0 0
        %850 = vmatpush1.bf16.msra.mxu0 %v380
        %851 = vmatprep.subr.bf16.mxu0 0
        %852 = vmatpush1.bf16.msra.mxu0 %v381
        %853 = vmatprep.subr.bf16.mxu0 0
        %854 = vmatpush1.bf16.msra.mxu0 %v382
        %855 = vmatprep.subr.bf16.mxu0 0
        %856 = vmatpush1.bf16.msra.mxu0 %v383
        %857 = vmatprep.subr.bf16.mxu0 0
        %858 = vmatpush1.bf16.msra.mxu0 0
        %859 = vmatprep.subr.bf16.mxu0 0
        %860 = vmatpush1.bf16.msra.mxu0 0
        %861 = vmatprep.subr.bf16.mxu0 0
        %862 = vmatpush1.bf16.msra.mxu0 0
        %863 = vmatprep.subr.bf16.mxu0 0
        %864 = vmatpush1.bf16.msra.mxu0 0
        %865 = vmatprep.subr.bf16.mxu0 0
        %866 = vmatpush1.bf16.msra.mxu0 0
        %867 = vmatprep.subr.bf16.mxu0 0
        %868 = vmatpush1.bf16.msra.mxu0 0
        %869 = vmatprep.subr.bf16.mxu0 0
        %870 = vmatpush1.bf16.msra.mxu0 0
        %871 = vmatprep.subr.bf16.mxu0 0
        %872 = vmatpush1.bf16.msra.mxu0 0
        %873 = vmatprep.mubr.bf16.mxu0 0
        %874 = vmatmul.mubr.bf16.gmra.mrb[0].mxu0 %v809
        %v875 = vpop.f32.mrb[0].mxu0
        %v876 = vadd.f32 0.0, %v875
        %v877 = vpop.f32.mrb[0].mxu0
        %v878 = vpop.f32.mrb[0].mxu0
        %v879 = vadd.f32 0.0, %v878
        %v880 = vpop.f32.mrb[0].mxu0
        %881 = vdwg.mxu0
        %v882 = vadd.f32 %v839, %v876
        %v883 = vadd.f32 %v840, %v879
        %v884 = vmul.f32 %v801, 0.5
        %v885 = vmul.f32 %v802, 0.5
        %v886 = vsub.bf16 1065369472, %v809
        %v887 = vunpack.c.l.bf16 %v886
        %v888 = vunpack.c.h.bf16 %v886
        %v889 = vmul.f32 %v884, %v887
        %v890 = vmul.f32 %v885, %v888
        %v891 = vadd.f32 %v889, %v882
        %v892 = vadd.f32 %v890, %v883
        %vm893 = vcmp.ge.f32.partialorder %v891, 0.5
        %vm894 = vcmp.ge.f32.partialorder %v892, 0.5
        %v895 = vsel %vm893, 1, 0
        %v896 = vsel %vm894, 1, 0
        %v897 = vcvt.s32.f32 %v895
        %v898 = vcvt.s32.f32 %v896
        %v899 = vpack.c.bf16 %v898, %v897
        %v901 = vunpack.c.l.b16 %v899
        %v902 = vunpack.c.h.b16 %v899
        %v903 = vpack.c.b16 %v901, %v901
        %v904 = vpack.c.b16 %v902, %v902
        %s907 = scalar_lea.vmem %s290, 40 [#allocation6]
        %908 = vst [vmem:[%s907] sm:$0xf] %v903
        %909 = vst [vmem:[%s907 + $0x4] sm:$0xf] %v904
        %v910 = vld [vmem:[#allocation4] sm:$0xff]
        %v911 = vld [vmem:[#allocation4 + $0x8] sm:$0xff]
        %v912 = vmul.f32 %v910, 0.8
        %v913 = vmul.f32 %v911, 0.8
        %v914 = vunpack.c.l.bf16 %v899
        %v915 = vunpack.c.h.bf16 %v899
        %v916 = vadd.f32 %v912, %v914
        %v917 = vadd.f32 %v913, %v915
        %918 = vst [vmem:[#allocation4] sm:$0xff] %v916
        %919 = vst [vmem:[#allocation4 + $0x8] sm:$0xff] %v917
        %v920 = vld [vmem:[%s306] sm:$0xff]
        %v921 = vld [vmem:[%s306 + $0x8] sm:$0xff]
        %v922 = vadd.f32 %v920, %v916
        %v923 = vadd.f32 %v921, %v917
        %924 = vst [vmem:[%s306] sm:$0xff] %v922
        %925 = vst [vmem:[%s306 + $0x8] sm:$0xff] %v923
        %s926 = scalar_lea.vmem %s272, 48 [#allocation5]
        %v927 = vld [vmem:[%s926] sm:$0xf]
        %v928 = vld [vmem:[%s926 + $0x4] sm:$0xf]
        %v929 = vunpack.c.l.bf16 %v927
        %v930 = vunpack.c.l.bf16 %v928
        %931 = vmatprep.subr.bf16.mxu0 0
        %932 = vmatpush1.bf16.msra.mxu0 %v376
        %933 = vmatprep.subr.bf16.mxu0 0
        %934 = vmatpush1.bf16.msra.mxu0 %v377
        %935 = vmatprep.subr.bf16.mxu0 0
        %936 = vmatpush1.bf16.msra.mxu0 %v378
        %937 = vmatprep.subr.bf16.mxu0 0
        %938 = vmatpush1.bf16.msra.mxu0 %v379
        %939 = vmatprep.subr.bf16.mxu0 0
        %940 = vmatpush1.bf16.msra.mxu0 %v380
        %941 = vmatprep.subr.bf16.mxu0 0
        %942 = vmatpush1.bf16.msra.mxu0 %v381
        %943 = vmatprep.subr.bf16.mxu0 0
        %944 = vmatpush1.bf16.msra.mxu0 %v382
        %945 = vmatprep.subr.bf16.mxu0 0
        %946 = vmatpush1.bf16.msra.mxu0 %v383
        %947 = vmatprep.subr.bf16.mxu0 0
        %948 = vmatpush1.bf16.msra.mxu0 0
        %949 = vmatprep.subr.bf16.mxu0 0
        %950 = vmatpush1.bf16.msra.mxu0 0
        %951 = vmatprep.subr.bf16.mxu0 0
        %952 = vmatpush1.bf16.msra.mxu0 0
        %953 = vmatprep.subr.bf16.mxu0 0
        %954 = vmatpush1.bf16.msra.mxu0 0
        %955 = vmatprep.subr.bf16.mxu0 0
        %956 = vmatpush1.bf16.msra.mxu0 0
        %957 = vmatprep.subr.bf16.mxu0 0
        %958 = vmatpush1.bf16.msra.mxu0 0
        %959 = vmatprep.subr.bf16.mxu0 0
        %960 = vmatpush1.bf16.msra.mxu0 0
        %961 = vmatprep.subr.bf16.mxu0 0
        %962 = vmatpush1.bf16.msra.mxu0 0
        %963 = vmatprep.mubr.bf16.mxu0 0
        %964 = vmatmul.mubr.bf16.gmra.mrb[0].mxu0 %v899
        %v965 = vpop.f32.mrb[0].mxu0
        %v966 = vadd.f32 0.0, %v965
        %v967 = vpop.f32.mrb[0].mxu0
        %v968 = vpop.f32.mrb[0].mxu0
        %v969 = vadd.f32 0.0, %v968
        %v970 = vpop.f32.mrb[0].mxu0
        %971 = vdwg.mxu0
        %v972 = vadd.f32 %v929, %v966
        %v973 = vadd.f32 %v930, %v969
        %v974 = vmul.f32 %v891, 0.5
        %v975 = vmul.f32 %v892, 0.5
        %v976 = vsub.bf16 1065369472, %v899
        %v977 = vunpack.c.l.bf16 %v976
        %v978 = vunpack.c.h.bf16 %v976
        %v979 = vmul.f32 %v974, %v977
        %v980 = vmul.f32 %v975, %v978
        %v981 = vadd.f32 %v979, %v972
        %v982 = vadd.f32 %v980, %v973
        %vm983 = vcmp.ge.f32.partialorder %v981, 0.5
        %vm984 = vcmp.ge.f32.partialorder %v982, 0.5
        %v985 = vsel %vm983, 1, 0
        %v986 = vsel %vm984, 1, 0
        %v987 = vcvt.s32.f32 %v985
        %v988 = vcvt.s32.f32 %v986
        %v989 = vpack.c.bf16 %v988, %v987
        %v991 = vunpack.c.l.b16 %v989
        %v992 = vunpack.c.h.b16 %v989
        %v993 = vpack.c.b16 %v991, %v991
        %v994 = vpack.c.b16 %v992, %v992
        %s997 = scalar_lea.vmem %s290, 48 [#allocation6]
        %998 = vst [vmem:[%s997] sm:$0xf] %v993
        %999 = vst [vmem:[%s997 + $0x4] sm:$0xf] %v994
        %v1000 = vld [vmem:[#allocation4] sm:$0xff]
        %v1001 = vld [vmem:[#allocation4 + $0x8] sm:$0xff]
        %v1002 = vmul.f32 %v1000, 0.8
        %v1003 = vmul.f32 %v1001, 0.8
        %v1004 = vunpack.c.l.bf16 %v989
        %v1005 = vunpack.c.h.bf16 %v989
        %v1006 = vadd.f32 %v1002, %v1004
        %v1007 = vadd.f32 %v1003, %v1005
        %1008 = vst [vmem:[#allocation4] sm:$0xff] %v1006
        %1009 = vst [vmem:[#allocation4 + $0x8] sm:$0xff] %v1007
        %v1010 = vld [vmem:[%s306] sm:$0xff]
        %v1011 = vld [vmem:[%s306 + $0x8] sm:$0xff]
        %v1012 = vadd.f32 %v1010, %v1006
        %v1013 = vadd.f32 %v1011, %v1007
        %1014 = vst [vmem:[%s306] sm:$0xff] %v1012
        %1015 = vst [vmem:[%s306 + $0x8] sm:$0xff] %v1013
        %s1016 = scalar_lea.vmem %s272, 56 [#allocation5]
        %v1017 = vld [vmem:[%s1016] sm:$0xf]
        %v1018 = vld [vmem:[%s1016 + $0x4] sm:$0xf]
        %v1019 = vunpack.c.l.bf16 %v1017
        %v1020 = vunpack.c.l.bf16 %v1018
        %1021 = vmatprep.subr.bf16.mxu0 0
        %1022 = vmatpush1.bf16.msra.mxu0 %v376
        %1023 = vmatprep.subr.bf16.mxu0 0
        %1024 = vmatpush1.bf16.msra.mxu0 %v377
        %1025 = vmatprep.subr.bf16.mxu0 0
        %1026 = vmatpush1.bf16.msra.mxu0 %v378
        %1027 = vmatprep.subr.bf16.mxu0 0
        %1028 = vmatpush1.bf16.msra.mxu0 %v379
        %1029 = vmatprep.subr.bf16.mxu0 0
        %1030 = vmatpush1.bf16.msra.mxu0 %v380
        %1031 = vmatprep.subr.bf16.mxu0 0
        %1032 = vmatpush1.bf16.msra.mxu0 %v381
        %1033 = vmatprep.subr.bf16.mxu0 0
        %1034 = vmatpush1.bf16.msra.mxu0 %v382
        %1035 = vmatprep.subr.bf16.mxu0 0
        %1036 = vmatpush1.bf16.msra.mxu0 %v383
        %1037 = vmatprep.subr.bf16.mxu0 0
        %1038 = vmatpush1.bf16.msra.mxu0 0
        %1039 = vmatprep.subr.bf16.mxu0 0
        %1040 = vmatpush1.bf16.msra.mxu0 0
        %1041 = vmatprep.subr.bf16.mxu0 0
        %1042 = vmatpush1.bf16.msra.mxu0 0
        %1043 = vmatprep.subr.bf16.mxu0 0
        %1044 = vmatpush1.bf16.msra.mxu0 0
        %1045 = vmatprep.subr.bf16.mxu0 0
        %1046 = vmatpush1.bf16.msra.mxu0 0
        %1047 = vmatprep.subr.bf16.mxu0 0
        %1048 = vmatpush1.bf16.msra.mxu0 0
        %1049 = vmatprep.subr.bf16.mxu0 0
        %1050 = vmatpush1.bf16.msra.mxu0 0
        %1051 = vmatprep.subr.bf16.mxu0 0
        %1052 = vmatpush1.bf16.msra.mxu0 0
        %1053 = vmatprep.mubr.bf16.mxu0 0
        %1054 = vmatmul.mubr.bf16.gmra.mrb[0].mxu0 %v989
        %v1055 = vpop.f32.mrb[0].mxu0
        %v1056 = vadd.f32 0.0, %v1055
        %v1057 = vpop.f32.mrb[0].mxu0
        %v1058 = vpop.f32.mrb[0].mxu0
        %v1059 = vadd.f32 0.0, %v1058
        %v1060 = vpop.f32.mrb[0].mxu0
        %1061 = vdwg.mxu0
        %v1062 = vadd.f32 %v1019, %v1056
        %v1063 = vadd.f32 %v1020, %v1059
        %v1064 = vmul.f32 %v981, 0.5
        %v1065 = vmul.f32 %v982, 0.5
        %v1066 = vsub.bf16 1065369472, %v989
        %v1067 = vunpack.c.l.bf16 %v1066
        %v1068 = vunpack.c.h.bf16 %v1066
        %v1069 = vmul.f32 %v1064, %v1067
        %v1070 = vmul.f32 %v1065, %v1068
        %v1071 = vadd.f32 %v1069, %v1062
        %v1072 = vadd.f32 %v1070, %v1063
        %vm1073 = vcmp.ge.f32.partialorder %v1071, 0.5
        %vm1074 = vcmp.ge.f32.partialorder %v1072, 0.5
        %v1075 = vsel %vm1073, 1, 0
        %v1076 = vsel %vm1074, 1, 0
        %v1077 = vcvt.s32.f32 %v1075
        %v1078 = vcvt.s32.f32 %v1076
        %v1079 = vpack.c.bf16 %v1078, %v1077
        %v1081 = vunpack.c.l.b16 %v1079
        %v1082 = vunpack.c.h.b16 %v1079
        %v1083 = vpack.c.b16 %v1081, %v1081
        %v1084 = vpack.c.b16 %v1082, %v1082
        %s1087 = scalar_lea.vmem %s290, 56 [#allocation6]
        %1088 = vst [vmem:[%s1087] sm:$0xf] %v1083
        %1089 = vst [vmem:[%s1087 + $0x4] sm:$0xf] %v1084
        %v1090 = vld [vmem:[#allocation4] sm:$0xff]
        %v1091 = vld [vmem:[#allocation4 + $0x8] sm:$0xff]
        %v1092 = vmul.f32 %v1090, 0.8
        %v1093 = vmul.f32 %v1091, 0.8
        %v1094 = vunpack.c.l.bf16 %v1079
        %v1095 = vunpack.c.h.bf16 %v1079
        %v1096 = vadd.f32 %v1092, %v1094
        %v1097 = vadd.f32 %v1093, %v1095
        %1098 = vst [vmem:[#allocation4] sm:$0xff] %v1096
        %1099 = vst [vmem:[#allocation4 + $0x8] sm:$0xff] %v1097
        %v1100 = vld [vmem:[%s306] sm:$0xff]
        %v1101 = vld [vmem:[%s306 + $0x8] sm:$0xff]
        %v1102 = vadd.f32 %v1100, %v1096
        %v1103 = vadd.f32 %v1101, %v1097
        %1104 = vst [vmem:[%s306] sm:$0xff] %v1102
        %1105 = vst [vmem:[%s306 + $0x8] sm:$0xff] %v1103
        %1106 = vst [vmem:[#allocation2] sm:$0xff] %v1071
        %1107 = vst [vmem:[#allocation2 + $0x8] sm:$0xff] %v1072
        %1108 = vst [vmem:[#allocation3] sm:$0xff] %v1079
        %s1109 = sand.u32 %s89, 1
        %s1110 = scalar_lea.sflag [#allocation7], %s1109
        %s1111 = sand.u32 %s89, 1
        %s1112 = smul.addr %s1111, 64
        %s1113 = scalar_lea.vmem [#allocation6], %s1112
        %s1114 = smul.u32 2, %s22
        %p1115 = scmp.lt.s32.totalorder %s1114, 3
        %s1116 = scalar_select %p1115, %s1114, 3
        %s1117 = smul.addr %s1116, 8
        %s1118 = scalar_lea.vmem %s3, %s1117
        // Predicated region
        $region74: #{spasrnn_forward.1} parent=64 // pred_check
          %p1119 = pneg %p99
        $region75: #{spasrnn_forward.1} parent=64 // pred_check_branch
          %1121 = sbr.rel (%p1119) target = $region77
        $region76: #{spasrnn_forward.1} parent=64 // pred_region
          #allocation9 [shape = 'u32[6]{0}', space=smem, size = 0x18, scoped, tag = 'DMA stride descriptor']
          %s1122 = smul.u32 8, %s23
          %s1123 = smul.u32 2, %s22
          %s1125 = ssub.s32 1024, 1024
          %1126 = vsyncadd %s1110, %s1125
          %s1127 = smul.addr %s1122, 4
          %s1128 = sadd.s32 %s1123, %s1127
          %s1129 = smul.addr %s1128, 64
          %s1130 = scalar_lea.hbm %s2, %s1129
          %s1132 = sshll.u32 1, 14
          %s1133 = sxor.u32 4294967295, %s1132
          %s1136 = sshll.u32 7, 18
          %s1137 = sxor.u32 4294967295, %s1136
          %s1138 = sand.u32 0, %s1137
          %s1140 = sor.u32 %s1138, 0
          %s1142 = sshll.u32 3, 24
          %s1143 = sxor.u32 4294967295, %s1142
          %s1144 = sand.u32 %s1140, %s1143
          %s1146 = sor.u32 %s1144, 0
          %s1147 = sshll.u32 %s1113, 4
          %s1148 = int_to_ptr.vmem [resolvable:$true] %s1147
          %1154 = sst [smem:[#allocation9]] 128
          %s1155 = scalar_lea.smem [#allocation9], 1
          %1156 = sst [smem:[%s1155]] 256
          %s1157 = scalar_lea.smem [#allocation9], 2
          %1158 = sst [smem:[%s1157]] 2
          %s1159 = scalar_lea.smem [#allocation9], 3
          %1160 = sst [smem:[%s1159]] 64
          %s1161 = scalar_lea.smem [#allocation9], 4
          %1162 = sst [smem:[%s1161]] 64
          %s1163 = scalar_lea.smem [#allocation9], 5
          %1164 = sst [smem:[%s1163]] 4
          %1166 = dma.general %s1148, 1024, %s1130, %s1110, [#allocation8], [#allocation9], %s1146, 0
        $region77: #{spasrnn_forward.1} parent=64 // pred_fallthru
          _
        // Predicated region
        $region78: #{spasrnn_forward.1} parent=64 // pred_check
          %p1167 = pneg %p125
        $region79: #{spasrnn_forward.1} parent=64 // pred_check_branch
          %1169 = sbr.rel (%p1167) target = $region81
        $region80: #{spasrnn_forward.1} parent=64 // pred_region
          %s1170 = smul.u32 2, %s22
        $region81: #{spasrnn_forward.1} parent=64 // pred_fallthru
          _
      $region65: #{spasrnn_forward.1} parent=5 // pred_fallthru
        _
      %p1171 = scmp.le.s32.totalorder 2, %s13
      // Predicated region
      $region82: #{spasrnn_forward.1} parent=5 // pred_check
        %p1172 = pneg %p1171
      $region83: #{spasrnn_forward.1} parent=5 // pred_check_branch
        %1174 = sbr.rel (%p1172) target = $region85
      $region84: #{spasrnn_forward.1} parent=5 // pred_region
        %s1175 = ssub.s32 %s13, 2
        // Predicated region
        $region86: #{spasrnn_forward.1} parent=84 // pred_check
          %p1176 = pneg %p105
        $region87: #{spasrnn_forward.1} parent=84 // pred_check_branch
          %1178 = sbr.rel (%p1176) target = $region89
        $region88: #{spasrnn_forward.1} parent=84 // pred_region
          %s1179 = sand.u32 %s90, 1
          %s1180 = scalar_lea.sflag [#allocation7], %s1179
          %s1181 = sand.u32 %s90, 1
          %s1182 = smul.addr %s1181, 64
          %s1183 = scalar_lea.vmem [#allocation6], %s1182
          %1184 = dma.done %s1180, 1024
        $region89: #{spasrnn_forward.1} parent=84 // pred_fallthru
          _
        // Predicated region
        $region90: #{spasrnn_forward.1} parent=84 // pred_check
          %p1185 = pneg %p131
        $region91: #{spasrnn_forward.1} parent=84 // pred_check_branch
          %1187 = sbr.rel (%p1185) target = $region93
        $region92: #{spasrnn_forward.1} parent=84 // pred_region
          %s1188 = smul.u32 2, %s24
          %p1189 = scmp.lt.s32.totalorder %s1188, 3
          %s1190 = scalar_select %p1189, %s1188, 3
          %s1191 = smul.addr %s1190, 8
          %s1192 = scalar_lea.vmem %s3, %s1191
        $region93: #{spasrnn_forward.1} parent=84 // pred_fallthru
          _
      $region85: #{spasrnn_forward.1} parent=5 // pred_fallthru
        _
    $region6: #{spasrnn_forward.1} parent=1 // loop_footer
      %s17 = sadd.s32 1, %s13
    $region7: #{spasrnn_forward.1} parent=1 // loop_footer_branch
      %12 = sbr.rel target = $region3
    $region8: #{spasrnn_forward.1} parent=1 // loop_exit
      _
    %1193 = vsyncpa [#allocation7], 1
    %s1194 = scalar_lea.sflag [#allocation7], 1
    %1195 = vsyncpa %s1194, 1

</llo_original>
